<compile_context>
chip_gen: v7x
topology: tpu7x:2x2x1
jax: 0.10.0
libtpu: 0.0.40
codegen_flags: <defaults>
</compile_context>

<pallas_src>
import functools

import jax
import jax.numpy as jnp
from jax.experimental import pallas as pl
from jax.experimental.pallas import tpu as pltpu

n = 28
N = n * n  # 784

# encoder: N->128->64->12->3 ; decoder: 3->12->64->128->N
LAYER_DIMS = [(N, 128), (128, 64), (64, 12), (12, 3),
              (3, 12), (12, 64), (64, 128), (128, N)]


def _round_up(x, m):
    return ((x + m - 1) // m) * m


def autoencoder_kernel(x_ref,
                       w1, b1, w2, b2, w3, b3, w45, b45,
                       w6, b6, w7, b7, w8, b8,
                       o_ref):
    """One batch tile of the full autoencoder forward.

    x is bf16, weights are bf16 (MXU inputs); accumulation, bias add, ReLU and
    the sigmoid epilogue stay in f32 (v5e-safe elementwise policy).  Output is
    stored as bf16.
    """
    h = x_ref[...]  # bf16, fed straight into the first MXU dot

    def lin(h, w_ref, b_ref):
        return jnp.dot(h.astype(jnp.bfloat16), w_ref[...],
                       preferred_element_type=jnp.float32) + b_ref[...]

    def lin_relu(h, w_ref, b_ref):
        return jnp.maximum(lin(h, w_ref, b_ref), 0.0)

    # encoder 784->128->64->12, fused 12->(3)->12 (no activation between the
    # two folded linears in the original module), decoder 12->64->128->784.
    h = lin_relu(h, w1, b1)
    h = lin_relu(h, w2, b2)
    h = lin_relu(h, w3, b3)
    h = lin_relu(h, w45, b45)
    h = lin_relu(h, w6, b6)
    h = lin_relu(h, w7, b7)
    logits = lin(h, w8, b8)

    # sigmoid(x) == 0.5 * tanh(0.5 * x) + 0.5 : one EUP transcendental per
    # element (instead of exp + reciprocal), exact.
    o_ref[...] = (0.5 * jnp.tanh(0.5 * logits) + 0.5).astype(o_ref.dtype)


@functools.partial(jax.jit, static_argnames=("tile_b",))
def autoencoder_forward(x, params, tile_b=2048):
    """Run the autoencoder forward.

    `params` is the 8-layer list from init_params.  `x` should preferably be
    bf16 already (the kernel consumes bf16); an f32 input is cast here, which
    costs one extra HBM round trip.
    Returns bf16 reconstructions of shape (B, 784).
    """
    B = x.shape[0]

    if x.dtype != jnp.bfloat16:
        # NOTE: fuse this convert into x's producer where possible.
        x = x.astype(jnp.bfloat16)

    ((w1, b1), (w2, b2), (w3, b3), (w4, b4),
     (w5, b5), (w6, b6), (w7, b7), (w8, b8)) = params

    # Fold encoder-final (12->3) and decoder-first (3->12) linears into one
    # 12->12 layer: no activation sits between them in the original module.
    w45 = w4 @ w5
    b45 = b4 @ w5 + b5

    weights = [w1, w2, w3, w45, w6, w7, w8]
    biases = [b1, b2, b3, b45, b6, b7, b8]

    # bf16 weights halve weight HBM traffic / VMEM and feed the bf16 MXU path;
    # biases stay f32 (added to the f32 accumulator).
    weights = [w.astype(jnp.bfloat16) for w in weights]
    biases = [b.astype(jnp.float32) for b in biases]

    # Batch tile: multiple of 16 (bf16 sublane packing).  Cap at ceil(B/2) so
    # the grid has >=2 steps whenever B allows it -> the "parallel" batch axis
    # shards across both v7x TensorCores.
    tb = min(tile_b, _round_up(-(-B // 2), 16))
    tb = max(tb, 16)
    b_pad = _round_up(B, tb)
    if b_pad != B:
        x = jnp.pad(x, ((0, b_pad - B), (0, 0)))

    grid = (b_pad // tb,)

    x_spec = pl.BlockSpec((tb, N), lambda i: (i, 0))
    out_spec = pl.BlockSpec((tb, N), lambda i: (i, 0))
    # Constant index_map -> same block every grid step -> weights stay
    # VMEM-resident across the batch loop (no re-DMA).
    w_specs = [pl.BlockSpec(w.shape, lambda i: (0, 0)) for w in weights]
    b_specs = [pl.BlockSpec(b.shape, lambda i: (0, 0)) for b in biases]

    flat_params = []
    in_specs = [x_spec]
    for w, b, ws, bs in zip(weights, biases, w_specs, b_specs):
        flat_params += [w, b]
        in_specs += [ws, bs]

    out = pl.pallas_call(
        autoencoder_kernel,
        out_shape=jax.ShapeDtypeStruct((b_pad, N), jnp.bfloat16),
        grid=grid,
        in_specs=in_specs,
        out_specs=out_spec,
        compiler_params=pltpu.CompilerParams(
            dimension_semantics=("parallel",),
            vmem_limit_bytes=48 * 1024 * 1024,
        ),
    )(x, *flat_params)

    return out[:B]


def init_params(key):
    """Deterministic init matching PyTorch nn.Linear default: U(-1/sqrt(fan_in), 1/sqrt(fan_in))."""
    params = []
    for (fan_in, fan_out) in LAYER_DIMS:
        key, kw, kb = jax.random.split(key, 3)
        bound = 1.0 / jnp.sqrt(jnp.float32(fan_in))
        w = jax.random.uniform(kw, (fan_in, fan_out), jnp.float32, -bound, bound)
        b = jax.random.uniform(kb, (1, fan_out), jnp.float32, -bound, bound)
        params.append((w, b))
    return params


def reference_forward(x, params):
    """Pure-JAX f32 reference (unfolded 8-layer form) for correctness check."""
    h = x
    for i in range(3):
        w, b = params[i]
        h = jnp.maximum(h @ w + b, 0.0)
    w, b = params[3]
    h = h @ w + b                      # encoder end, no activation
    for i in range(4, 7):
        w, b = params[i]
        h = jnp.maximum(h @ w + b, 0.0)
    w, b = params[7]
    return jax.nn.sigmoid(h @ w + b)


if __name__ == "__main__":
    key = jax.random.PRNGKey(0)
    key, kx1, kx2 = jax.random.split(key, 3)

    params = init_params(key)

    # Small batch (single grid step).  x is produced in bf16 (kernel contract).
    B1 = 8
    x1 = jax.random.uniform(kx1, (B1, N), jnp.float32).astype(jnp.bfloat16)
    out1 = jax.block_until_ready(autoencoder_forward(x1, params))
    ref1 = reference_forward(x1.astype(jnp.float32), params)
    assert out1.shape == (B1, N)
    assert out1.dtype == jnp.bfloat16
    # bf16 MXU inputs + bf16 output rounding -> looser tolerance than pure f32.
    assert jnp.max(jnp.abs(out1.astype(jnp.float32) - ref1)) < 3e-2, \
        "mismatch vs reference (B=8)"

    # Non-multiple batch with a small tile to exercise the multi-step grid
    # (tile padding + parallel batch axis sharded across cores).
    B2 = 300
    x2 = jax.random.uniform(kx2, (B2, N), jnp.float32).astype(jnp.bfloat16)
    out2 = jax.block_until_ready(autoencoder_forward(x2, params, tile_b=128))
    ref2 = reference_forward(x2.astype(jnp.float32), params)
    assert out2.shape == (B2, N)
    assert jnp.max(jnp.abs(out2.astype(jnp.float32) - ref2)) < 3e-2, \
        "mismatch vs reference (B=300)"

    print("KERNEL_OK")
</pallas_src>

<mosaic_0001>
module attributes {stable_mosaic.version = 11 : i64} {
  func.func @autoencoder_kernel(%arg0: i32, %arg1: memref<16x784xbf16, #tpu.memory_space<vmem>>, %arg2: memref<784x128xbf16, #tpu.memory_space<vmem>>, %arg3: memref<1x128xf32, #tpu.memory_space<vmem>>, %arg4: memref<128x64xbf16, #tpu.memory_space<vmem>>, %arg5: memref<1x64xf32, #tpu.memory_space<vmem>>, %arg6: memref<64x12xbf16, #tpu.memory_space<vmem>>, %arg7: memref<1x12xf32, #tpu.memory_space<vmem>>, %arg8: memref<12x12xbf16, #tpu.memory_space<vmem>>, %arg9: memref<1x12xf32, #tpu.memory_space<vmem>>, %arg10: memref<12x64xbf16, #tpu.memory_space<vmem>>, %arg11: memref<1x64xf32, #tpu.memory_space<vmem>>, %arg12: memref<64x128xbf16, #tpu.memory_space<vmem>>, %arg13: memref<1x128xf32, #tpu.memory_space<vmem>>, %arg14: memref<128x784xbf16, #tpu.memory_space<vmem>>, %arg15: memref<1x784xf32, #tpu.memory_space<vmem>>, %arg16: memref<16x784xbf16, #tpu.memory_space<vmem>>) attributes {dimension_semantics = [#tpu.dimension_semantics<parallel>], iteration_bounds = array<i64: 1>, scalar_prefetch = 0 : i64, scratch_operands = 0 : i64, tpu.core_type = #tpu.core_type<tc>, window_params = [{transform_indices = @transform_0, window_bounds = array<i64: 16, 784>}, {pipeline_mode = #tpu.pipeline_mode<synchronous>, transform_indices = @transform_1, window_bounds = array<i64: 784, 128>}, {pipeline_mode = #tpu.pipeline_mode<synchronous>, transform_indices = @transform_2, window_bounds = array<i64: 1, 128>}, {pipeline_mode = #tpu.pipeline_mode<synchronous>, transform_indices = @transform_3, window_bounds = array<i64: 128, 64>}, {pipeline_mode = #tpu.pipeline_mode<synchronous>, transform_indices = @transform_4, window_bounds = array<i64: 1, 64>}, {pipeline_mode = #tpu.pipeline_mode<synchronous>, transform_indices = @transform_5, window_bounds = array<i64: 64, 12>}, {pipeline_mode = #tpu.pipeline_mode<synchronous>, transform_indices = @transform_6, window_bounds = array<i64: 1, 12>}, {pipeline_mode = #tpu.pipeline_mode<synchronous>, transform_indices = @transform_7, window_bounds = array<i64: 12, 12>}, {pipeline_mode = #tpu.pipeline_mode<synchronous>, transform_indices = @transform_8, window_bounds = array<i64: 1, 12>}, {pipeline_mode = #tpu.pipeline_mode<synchronous>, transform_indices = @transform_9, window_bounds = array<i64: 12, 64>}, {pipeline_mode = #tpu.pipeline_mode<synchronous>, transform_indices = @transform_10, window_bounds = array<i64: 1, 64>}, {pipeline_mode = #tpu.pipeline_mode<synchronous>, transform_indices = @transform_11, window_bounds = array<i64: 64, 128>}, {pipeline_mode = #tpu.pipeline_mode<synchronous>, transform_indices = @transform_12, window_bounds = array<i64: 1, 128>}, {pipeline_mode = #tpu.pipeline_mode<synchronous>, transform_indices = @transform_13, window_bounds = array<i64: 128, 784>}, {pipeline_mode = #tpu.pipeline_mode<synchronous>, transform_indices = @transform_14, window_bounds = array<i64: 1, 784>}, {transform_indices = @transform_15, window_bounds = array<i64: 16, 784>}]} {
    %c0 = arith.constant 0 : index
    %c0_0 = arith.constant 0 : index
    %0 = vector.load %arg1[%c0, %c0_0] : memref<16x784xbf16, #tpu.memory_space<vmem>>, vector<16x784xbf16>
    %c0_1 = arith.constant 0 : index
    %c0_2 = arith.constant 0 : index
    %1 = vector.load %arg2[%c0_1, %c0_2] : memref<784x128xbf16, #tpu.memory_space<vmem>>, vector<784x128xbf16>
    %cst = arith.constant dense<0.000000e+00> : vector<16x128xf32>
    %2 = tpu.matmul %0, %1, %cst {dimension_numbers = #tpu.dot_dimension_numbers<[1], [0], [0], [1], [0, 0, 1, 1], [], []>} : vector<16x784xbf16>, vector<784x128xbf16>, vector<16x128xf32> -> vector<16x128xf32>
    %c0_3 = arith.constant 0 : index
    %c0_4 = arith.constant 0 : index
    %3 = vector.load %arg3[%c0_3, %c0_4] : memref<1x128xf32, #tpu.memory_space<vmem>>, vector<1x128xf32>
    %4 = vector.broadcast %3 : vector<1x128xf32> to vector<16x128xf32>
    %5 = arith.addf %2, %4 : vector<16x128xf32>
    %cst_5 = arith.constant 0.000000e+00 : f32
    %6 = vector.broadcast %cst_5 : f32 to vector<16x128xf32>
    %7 = arith.maximumf %5, %6 : vector<16x128xf32>
    %8 = arith.truncf %7 : vector<16x128xf32> to vector<16x128xbf16>
    %c0_6 = arith.constant 0 : index
    %c0_7 = arith.constant 0 : index
    %9 = vector.load %arg4[%c0_6, %c0_7] : memref<128x64xbf16, #tpu.memory_space<vmem>>, vector<128x64xbf16>
    %cst_8 = arith.constant dense<0.000000e+00> : vector<16x64xf32>
    %10 = tpu.matmul %8, %9, %cst_8 {dimension_numbers = #tpu.dot_dimension_numbers<[1], [0], [0], [1], [0, 0, 1, 1], [], []>} : vector<16x128xbf16>, vector<128x64xbf16>, vector<16x64xf32> -> vector<16x64xf32>
    %c0_9 = arith.constant 0 : index
    %c0_10 = arith.constant 0 : index
    %11 = vector.load %arg5[%c0_9, %c0_10] : memref<1x64xf32, #tpu.memory_space<vmem>>, vector<1x64xf32>
    %12 = vector.broadcast %11 : vector<1x64xf32> to vector<16x64xf32>
    %13 = arith.addf %10, %12 : vector<16x64xf32>
    %cst_11 = arith.constant 0.000000e+00 : f32
    %14 = vector.broadcast %cst_11 : f32 to vector<16x64xf32>
    %15 = arith.maximumf %13, %14 : vector<16x64xf32>
    %16 = arith.truncf %15 : vector<16x64xf32> to vector<16x64xbf16>
    %c0_12 = arith.constant 0 : index
    %c0_13 = arith.constant 0 : index
    %17 = vector.load %arg6[%c0_12, %c0_13] : memref<64x12xbf16, #tpu.memory_space<vmem>>, vector<64x12xbf16>
    %cst_14 = arith.constant dense<0.000000e+00> : vector<16x12xf32>
    %18 = tpu.matmul %16, %17, %cst_14 {dimension_numbers = #tpu.dot_dimension_numbers<[1], [0], [0], [1], [0, 0, 1, 1], [], []>} : vector<16x64xbf16>, vector<64x12xbf16>, vector<16x12xf32> -> vector<16x12xf32>
    %c0_15 = arith.constant 0 : index
    %c0_16 = arith.constant 0 : index
    %19 = vector.load %arg7[%c0_15, %c0_16] : memref<1x12xf32, #tpu.memory_space<vmem>>, vector<1x12xf32>
    %20 = vector.broadcast %19 : vector<1x12xf32> to vector<16x12xf32>
    %21 = arith.addf %18, %20 : vector<16x12xf32>
    %cst_17 = arith.constant 0.000000e+00 : f32
    %22 = vector.broadcast %cst_17 : f32 to vector<16x12xf32>
    %23 = arith.maximumf %21, %22 : vector<16x12xf32>
    %24 = arith.truncf %23 : vector<16x12xf32> to vector<16x12xbf16>
    %c0_18 = arith.constant 0 : index
    %c0_19 = arith.constant 0 : index
    %25 = vector.load %arg8[%c0_18, %c0_19] : memref<12x12xbf16, #tpu.memory_space<vmem>>, vector<12x12xbf16>
    %cst_20 = arith.constant dense<0.000000e+00> : vector<16x12xf32>
    %26 = tpu.matmul %24, %25, %cst_20 {dimension_numbers = #tpu.dot_dimension_numbers<[1], [0], [0], [1], [0, 0, 1, 1], [], []>} : vector<16x12xbf16>, vector<12x12xbf16>, vector<16x12xf32> -> vector<16x12xf32>
    %c0_21 = arith.constant 0 : index
    %c0_22 = arith.constant 0 : index
    %27 = vector.load %arg9[%c0_21, %c0_22] : memref<1x12xf32, #tpu.memory_space<vmem>>, vector<1x12xf32>
    %28 = vector.broadcast %27 : vector<1x12xf32> to vector<16x12xf32>
    %29 = arith.addf %26, %28 : vector<16x12xf32>
    %cst_23 = arith.constant 0.000000e+00 : f32
    %30 = vector.broadcast %cst_23 : f32 to vector<16x12xf32>
    %31 = arith.maximumf %29, %30 : vector<16x12xf32>
    %32 = arith.truncf %31 : vector<16x12xf32> to vector<16x12xbf16>
    %c0_24 = arith.constant 0 : index
    %c0_25 = arith.constant 0 : index
    %33 = vector.load %arg10[%c0_24, %c0_25] : memref<12x64xbf16, #tpu.memory_space<vmem>>, vector<12x64xbf16>
    %cst_26 = arith.constant dense<0.000000e+00> : vector<16x64xf32>
    %34 = tpu.matmul %32, %33, %cst_26 {dimension_numbers = #tpu.dot_dimension_numbers<[1], [0], [0], [1], [0, 0, 1, 1], [], []>} : vector<16x12xbf16>, vector<12x64xbf16>, vector<16x64xf32> -> vector<16x64xf32>
    %c0_27 = arith.constant 0 : index
    %c0_28 = arith.constant 0 : index
    %35 = vector.load %arg11[%c0_27, %c0_28] : memref<1x64xf32, #tpu.memory_space<vmem>>, vector<1x64xf32>
    %36 = vector.broadcast %35 : vector<1x64xf32> to vector<16x64xf32>
    %37 = arith.addf %34, %36 : vector<16x64xf32>
    %cst_29 = arith.constant 0.000000e+00 : f32
    %38 = vector.broadcast %cst_29 : f32 to vector<16x64xf32>
    %39 = arith.maximumf %37, %38 : vector<16x64xf32>
    %40 = arith.truncf %39 : vector<16x64xf32> to vector<16x64xbf16>
    %c0_30 = arith.constant 0 : index
    %c0_31 = arith.constant 0 : index
    %41 = vector.load %arg12[%c0_30, %c0_31] : memref<64x128xbf16, #tpu.memory_space<vmem>>, vector<64x128xbf16>
    %cst_32 = arith.constant dense<0.000000e+00> : vector<16x128xf32>
    %42 = tpu.matmul %40, %41, %cst_32 {dimension_numbers = #tpu.dot_dimension_numbers<[1], [0], [0], [1], [0, 0, 1, 1], [], []>} : vector<16x64xbf16>, vector<64x128xbf16>, vector<16x128xf32> -> vector<16x128xf32>
    %c0_33 = arith.constant 0 : index
    %c0_34 = arith.constant 0 : index
    %43 = vector.load %arg13[%c0_33, %c0_34] : memref<1x128xf32, #tpu.memory_space<vmem>>, vector<1x128xf32>
    %44 = vector.broadcast %43 : vector<1x128xf32> to vector<16x128xf32>
    %45 = arith.addf %42, %44 : vector<16x128xf32>
    %cst_35 = arith.constant 0.000000e+00 : f32
    %46 = vector.broadcast %cst_35 : f32 to vector<16x128xf32>
    %47 = arith.maximumf %45, %46 : vector<16x128xf32>
    %48 = arith.truncf %47 : vector<16x128xf32> to vector<16x128xbf16>
    %c0_36 = arith.constant 0 : index
    %c0_37 = arith.constant 0 : index
    %49 = vector.load %arg14[%c0_36, %c0_37] : memref<128x784xbf16, #tpu.memory_space<vmem>>, vector<128x784xbf16>
    %cst_38 = arith.constant dense<0.000000e+00> : vector<16x784xf32>
    %50 = tpu.matmul %48, %49, %cst_38 {dimension_numbers = #tpu.dot_dimension_numbers<[1], [0], [0], [1], [0, 0, 1, 1], [], []>} : vector<16x128xbf16>, vector<128x784xbf16>, vector<16x784xf32> -> vector<16x784xf32>
    %c0_39 = arith.constant 0 : index
    %c0_40 = arith.constant 0 : index
    %51 = vector.load %arg15[%c0_39, %c0_40] : memref<1x784xf32, #tpu.memory_space<vmem>>, vector<1x784xf32>
    %52 = vector.broadcast %51 : vector<1x784xf32> to vector<16x784xf32>
    %53 = arith.addf %50, %52 : vector<16x784xf32>
    %cst_41 = arith.constant 5.000000e-01 : f32
    %54 = vector.broadcast %cst_41 : f32 to vector<16x784xf32>
    %55 = arith.mulf %54, %53 : vector<16x784xf32>
    %56 = math.tanh %55 : vector<16x784xf32>
    %cst_42 = arith.constant 5.000000e-01 : f32
    %57 = vector.broadcast %cst_42 : f32 to vector<16x784xf32>
    %58 = arith.mulf %57, %56 : vector<16x784xf32>
    %cst_43 = arith.constant 5.000000e-01 : f32
    %59 = vector.broadcast %cst_43 : f32 to vector<16x784xf32>
    %60 = arith.addf %58, %59 : vector<16x784xf32>
    %61 = arith.truncf %60 : vector<16x784xf32> to vector<16x784xbf16>
    %c0_44 = arith.constant 0 : index
    %c0_45 = arith.constant 0 : index
    %62 = vector.load %arg16[%c0_44, %c0_45] : memref<16x784xbf16, #tpu.memory_space<vmem>>, vector<16x784xbf16>
    tpu.vector_store %arg16[%c0_44, %c0_45], %61 {strides = array<i32>} : memref<16x784xbf16, #tpu.memory_space<vmem>>, vector<16x784xbf16>,
    return
  }
  func.func @transform_0(%arg0: i32) -> (i32, i32) {
    %c0_i32 = arith.constant 0 : i32
    %c0_i32_0 = arith.constant 0 : i32
    return %arg0, %c0_i32 : i32, i32
  }
  func.func @transform_1(%arg0: i32) -> (i32, i32) {
    %c0_i32 = arith.constant 0 : i32
    %c0_i32_0 = arith.constant 0 : i32
    %c0_i32_1 = arith.constant 0 : i32
    return %c0_i32, %c0_i32_0 : i32, i32
  }
  func.func @transform_2(%arg0: i32) -> (i32, i32) {
    %c0_i32 = arith.constant 0 : i32
    %c0_i32_0 = arith.constant 0 : i32
    %c0_i32_1 = arith.constant 0 : i32
    return %c0_i32, %c0_i32_0 : i32, i32
  }
  func.func @transform_3(%arg0: i32) -> (i32, i32) {
    %c0_i32 = arith.constant 0 : i32
    %c0_i32_0 = arith.constant 0 : i32
    %c0_i32_1 = arith.constant 0 : i32
    return %c0_i32, %c0_i32_0 : i32, i32
  }
  func.func @transform_4(%arg0: i32) -> (i32, i32) {
    %c0_i32 = arith.constant 0 : i32
    %c0_i32_0 = arith.constant 0 : i32
    %c0_i32_1 = arith.constant 0 : i32
    return %c0_i32, %c0_i32_0 : i32, i32
  }
  func.func @transform_5(%arg0: i32) -> (i32, i32) {
    %c0_i32 = arith.constant 0 : i32
    %c0_i32_0 = arith.constant 0 : i32
    %c0_i32_1 = arith.constant 0 : i32
    return %c0_i32, %c0_i32_0 : i32, i32
  }
  func.func @transform_6(%arg0: i32) -> (i32, i32) {
    %c0_i32 = arith.constant 0 : i32
    %c0_i32_0 = arith.constant 0 : i32
    %c0_i32_1 = arith.constant 0 : i32
    return %c0_i32, %c0_i32_0 : i32, i32
  }
  func.func @transform_7(%arg0: i32) -> (i32, i32) {
    %c0_i32 = arith.constant 0 : i32
    %c0_i32_0 = arith.constant 0 : i32
    %c0_i32_1 = arith.constant 0 : i32
    return %c0_i32, %c0_i32_0 : i32, i32
  }
  func.func @transform_8(%arg0: i32) -> (i32, i32) {
    %c0_i32 = arith.constant 0 : i32
    %c0_i32_0 = arith.constant 0 : i32
    %c0_i32_1 = arith.constant 0 : i32
    return %c0_i32, %c0_i32_0 : i32, i32
  }
  func.func @transform_9(%arg0: i32) -> (i32, i32) {
    %c0_i32 = arith.constant 0 : i32
    %c0_i32_0 = arith.constant 0 : i32
    %c0_i32_1 = arith.constant 0 : i32
    return %c0_i32, %c0_i32_0 : i32, i32
  }
  func.func @transform_10(%arg0: i32) -> (i32, i32) {
    %c0_i32 = arith.constant 0 : i32
    %c0_i32_0 = arith.constant 0 : i32
    %c0_i32_1 = arith.constant 0 : i32
    return %c0_i32, %c0_i32_0 : i32, i32
  }
  func.func @transform_11(%arg0: i32) -> (i32, i32) {
    %c0_i32 = arith.constant 0 : i32
    %c0_i32_0 = arith.constant 0 : i32
    %c0_i32_1 = arith.constant 0 : i32
    return %c0_i32, %c0_i32_0 : i32, i32
  }
  func.func @transform_12(%arg0: i32) -> (i32, i32) {
    %c0_i32 = arith.constant 0 : i32
    %c0_i32_0 = arith.constant 0 : i32
    %c0_i32_1 = arith.constant 0 : i32
    return %c0_i32, %c0_i32_0 : i32, i32
  }
  func.func @transform_13(%arg0: i32) -> (i32, i32) {
    %c0_i32 = arith.constant 0 : i32
    %c0_i32_0 = arith.constant 0 : i32
    %c0_i32_1 = arith.constant 0 : i32
    return %c0_i32, %c0_i32_0 : i32, i32
  }
  func.func @transform_14(%arg0: i32) -> (i32, i32) {
    %c0_i32 = arith.constant 0 : i32
    %c0_i32_0 = arith.constant 0 : i32
    %c0_i32_1 = arith.constant 0 : i32
    return %c0_i32, %c0_i32_0 : i32, i32
  }
  func.func @transform_15(%arg0: i32) -> (i32, i32) {
    %c0_i32 = arith.constant 0 : i32
    %c0_i32_0 = arith.constant 0 : i32
    return %arg0, %c0_i32 : i32, i32
  }
}

</mosaic_0001>

<llo_original>
// kernel: autoencoder_forward.1
$region0: #{autoencoder_forward.1}
  #allocation0 [shape = 'u32[]', space=smem, size = 0x4, offset = 0x4, fixed_abs, tag = 'smem constant byte address 0x4 - core index']
  #allocation1 [shape = 'u32[144,128]{1,0:T(1,128)}', space=vmem, size = 0x12000, scoped, tag = 'internal scratch']
  %s0 = inlined_call_operand.vmem [shape: bf16[16,784], index: 0, kind: input, shape index: {}]
  %s1 = inlined_call_operand.vmem [shape: bf16[784,128], index: 1, kind: input, shape index: {}]
  %s2 = inlined_call_operand.vmem [shape: f32[1,128], index: 2, kind: input, shape index: {}]
  %s3 = inlined_call_operand.vmem [shape: bf16[128,64], index: 3, kind: input, shape index: {}]
  %s4 = inlined_call_operand.vmem [shape: f32[1,64], index: 4, kind: input, shape index: {}]
  %s5 = inlined_call_operand.vmem [shape: bf16[64,12], index: 5, kind: input, shape index: {}]
  %s6 = inlined_call_operand.vmem [shape: f32[1,12], index: 6, kind: input, shape index: {}]
  %s7 = inlined_call_operand.vmem [shape: bf16[12,12], index: 7, kind: input, shape index: {}]
  %s8 = inlined_call_operand.vmem [shape: f32[1,12], index: 8, kind: input, shape index: {}]
  %s9 = inlined_call_operand.vmem [shape: bf16[12,64], index: 9, kind: input, shape index: {}]
  %s10 = inlined_call_operand.vmem [shape: f32[1,64], index: 10, kind: input, shape index: {}]
  %s11 = inlined_call_operand.vmem [shape: bf16[64,128], index: 11, kind: input, shape index: {}]
  %s12 = inlined_call_operand.vmem [shape: f32[1,128], index: 12, kind: input, shape index: {}]
  %s13 = inlined_call_operand.vmem [shape: bf16[128,784], index: 13, kind: input, shape index: {}]
  %s14 = inlined_call_operand.vmem [shape: f32[1,784], index: 14, kind: input, shape index: {}]
  %s15 = inlined_call_operand.vmem [shape: bf16[16,784], index: 15, kind: output, shape index: {}]
  %s16 = sld [smem:[#allocation0]]
  $region70: #{autoencoder_forward.1} parent=0
    _
  %s18 = ssub.s32 1, %s16
  %s19 = scalar_select 0, %s18, %s16
  // Predicated region
  $region2: #{autoencoder_forward.1} parent=0 // pred_check
    _
  $region3: #{autoencoder_forward.1} parent=0 // pred_check_branch
    %21 = sbr.rel (0) target = $region5
  $region4: #{autoencoder_forward.1} parent=0 // pred_region
    _
  $region5: #{autoencoder_forward.1} parent=0 // pred_fallthru
    _
  // Predicated region
  $region6: #{autoencoder_forward.1} parent=0 // pred_check
    _
  $region7: #{autoencoder_forward.1} parent=0 // pred_check_branch
    %23 = sbr.rel (0) target = $region9
  $region8: #{autoencoder_forward.1} parent=0 // pred_region
    _
  $region9: #{autoencoder_forward.1} parent=0 // pred_fallthru
    _
  // Predicated region
  $region10: #{autoencoder_forward.1} parent=0 // pred_check
    _
  $region11: #{autoencoder_forward.1} parent=0 // pred_check_branch
    %25 = sbr.rel (0) target = $region13
  $region12: #{autoencoder_forward.1} parent=0 // pred_region
    _
  $region13: #{autoencoder_forward.1} parent=0 // pred_fallthru
    _
  // Predicated region
  $region14: #{autoencoder_forward.1} parent=0 // pred_check
    _
  $region15: #{autoencoder_forward.1} parent=0 // pred_check_branch
    %27 = sbr.rel (0) target = $region17
  $region16: #{autoencoder_forward.1} parent=0 // pred_region
    _
  $region17: #{autoencoder_forward.1} parent=0 // pred_fallthru
    _
  // Predicated region
  $region18: #{autoencoder_forward.1} parent=0 // pred_check
    _
  $region19: #{autoencoder_forward.1} parent=0 // pred_check_branch
    %29 = sbr.rel (0) target = $region21
  $region20: #{autoencoder_forward.1} parent=0 // pred_region
    _
  $region21: #{autoencoder_forward.1} parent=0 // pred_fallthru
    _
  // Predicated region
  $region22: #{autoencoder_forward.1} parent=0 // pred_check
    _
  $region23: #{autoencoder_forward.1} parent=0 // pred_check_branch
    %31 = sbr.rel (0) target = $region25
  $region24: #{autoencoder_forward.1} parent=0 // pred_region
    _
  $region25: #{autoencoder_forward.1} parent=0 // pred_fallthru
    _
  // Predicated region
  $region26: #{autoencoder_forward.1} parent=0 // pred_check
    _
  $region27: #{autoencoder_forward.1} parent=0 // pred_check_branch
    %33 = sbr.rel (0) target = $region29
  $region28: #{autoencoder_forward.1} parent=0 // pred_region
    _
  $region29: #{autoencoder_forward.1} parent=0 // pred_fallthru
    _
  // Predicated region
  $region30: #{autoencoder_forward.1} parent=0 // pred_check
    _
  $region31: #{autoencoder_forward.1} parent=0 // pred_check_branch
    %35 = sbr.rel (0) target = $region33
  $region32: #{autoencoder_forward.1} parent=0 // pred_region
    _
  $region33: #{autoencoder_forward.1} parent=0 // pred_fallthru
    _
  // Predicated region
  $region34: #{autoencoder_forward.1} parent=0 // pred_check
    _
  $region35: #{autoencoder_forward.1} parent=0 // pred_check_branch
    %37 = sbr.rel (0) target = $region37
  $region36: #{autoencoder_forward.1} parent=0 // pred_region
    _
  $region37: #{autoencoder_forward.1} parent=0 // pred_fallthru
    _
  // Predicated region
  $region38: #{autoencoder_forward.1} parent=0 // pred_check
    _
  $region39: #{autoencoder_forward.1} parent=0 // pred_check_branch
    %39 = sbr.rel (0) target = $region41
  $region40: #{autoencoder_forward.1} parent=0 // pred_region
    _
  $region41: #{autoencoder_forward.1} parent=0 // pred_fallthru
    _
  // Predicated region
  $region42: #{autoencoder_forward.1} parent=0 // pred_check
    _
  $region43: #{autoencoder_forward.1} parent=0 // pred_check_branch
    %41 = sbr.rel (0) target = $region45
  $region44: #{autoencoder_forward.1} parent=0 // pred_region
    _
  $region45: #{autoencoder_forward.1} parent=0 // pred_fallthru
    _
  // Predicated region
  $region46: #{autoencoder_forward.1} parent=0 // pred_check
    _
  $region47: #{autoencoder_forward.1} parent=0 // pred_check_branch
    %43 = sbr.rel (0) target = $region49
  $region48: #{autoencoder_forward.1} parent=0 // pred_region
    _
  $region49: #{autoencoder_forward.1} parent=0 // pred_fallthru
    _
  // Predicated region
  $region50: #{autoencoder_forward.1} parent=0 // pred_check
    _
  $region51: #{autoencoder_forward.1} parent=0 // pred_check_branch
    %45 = sbr.rel (0) target = $region53
  $region52: #{autoencoder_forward.1} parent=0 // pred_region
    _
  $region53: #{autoencoder_forward.1} parent=0 // pred_fallthru
    _
  // Predicated region
  $region54: #{autoencoder_forward.1} parent=0 // pred_check
    _
  $region55: #{autoencoder_forward.1} parent=0 // pred_check_branch
    %47 = sbr.rel (0) target = $region57
  $region56: #{autoencoder_forward.1} parent=0 // pred_region
    _
  $region57: #{autoencoder_forward.1} parent=0 // pred_fallthru
    _
  // Predicated region
  $region58: #{autoencoder_forward.1} parent=0 // pred_check
    _
  $region59: #{autoencoder_forward.1} parent=0 // pred_check_branch
    %49 = sbr.rel (0) target = $region61
  $region60: #{autoencoder_forward.1} parent=0 // pred_region
    _
  $region61: #{autoencoder_forward.1} parent=0 // pred_fallthru
    _
  %v51 = vld [vmem:[%s0] sm:$0xff]
  %v52 = vld [vmem:[%s0 + $0x8] sm:$0xff]
  %v53 = vld [vmem:[%s0 + $0x10] sm:$0xff]
  %v54 = vld [vmem:[%s0 + $0x18] sm:$0xf]
  %v55 = vld [vmem:[%s0 + $0x1c] sm:$0xff]
  %v56 = vld [vmem:[%s0 + $0x24] sm:$0xff]
  %v57 = vld [vmem:[%s0 + $0x2c] sm:$0xff]
  %v58 = vld [vmem:[%s0 + $0x34] sm:$0xf]
  %v59 = vld [vmem:[%s1] sm:$0xf]
  %v60 = vld [vmem:[%s1 + $0x4] sm:$0xf]
  %v61 = vld [vmem:[%s1 + $0x8] sm:$0xf]
  %v62 = vld [vmem:[%s1 + $0xc] sm:$0xf]
  %v63 = vld [vmem:[%s1 + $0x10] sm:$0xf]
  %v64 = vld [vmem:[%s1 + $0x14] sm:$0xf]
  %v65 = vld [vmem:[%s1 + $0x18] sm:$0xf]
  %v66 = vld [vmem:[%s1 + $0x1c] sm:$0xf]
  %v67 = vld [vmem:[%s1 + $0x20] sm:$0xf]
  %v68 = vld [vmem:[%s1 + $0x24] sm:$0xf]
  %v69 = vld [vmem:[%s1 + $0x28] sm:$0xf]
  %v70 = vld [vmem:[%s1 + $0x2c] sm:$0xf]
  %v71 = vld [vmem:[%s1 + $0x30] sm:$0xf]
  %v72 = vld [vmem:[%s1 + $0x34] sm:$0xf]
  %v73 = vld [vmem:[%s1 + $0x38] sm:$0xf]
  %v74 = vld [vmem:[%s1 + $0x3c] sm:$0xf]
  %v75 = vld [vmem:[%s1 + $0x40] sm:$0xf]
  %v76 = vld [vmem:[%s1 + $0x44] sm:$0xf]
  %v77 = vld [vmem:[%s1 + $0x48] sm:$0xf]
  %v78 = vld [vmem:[%s1 + $0x4c] sm:$0xf]
  %v79 = vld [vmem:[%s1 + $0x50] sm:$0xf]
  %v80 = vld [vmem:[%s1 + $0x54] sm:$0xf]
  %v81 = vld [vmem:[%s1 + $0x58] sm:$0xf]
  %v82 = vld [vmem:[%s1 + $0x5c] sm:$0xf]
  %v83 = vld [vmem:[%s1 + $0x60] sm:$0xf]
  %v84 = vld [vmem:[%s1 + $0x64] sm:$0xf]
  %v85 = vld [vmem:[%s1 + $0x68] sm:$0xf]
  %v86 = vld [vmem:[%s1 + $0x6c] sm:$0xf]
  %v87 = vld [vmem:[%s1 + $0x70] sm:$0xf]
  %v88 = vld [vmem:[%s1 + $0x74] sm:$0xf]
  %v89 = vld [vmem:[%s1 + $0x78] sm:$0xf]
  %v90 = vld [vmem:[%s1 + $0x7c] sm:$0xf]
  %v91 = vld [vmem:[%s1 + $0x80] sm:$0xf]
  %v92 = vld [vmem:[%s1 + $0x84] sm:$0xf]
  %v93 = vld [vmem:[%s1 + $0x88] sm:$0xf]
  %v94 = vld [vmem:[%s1 + $0x8c] sm:$0xf]
  %v95 = vld [vmem:[%s1 + $0x90] sm:$0xf]
  %v96 = vld [vmem:[%s1 + $0x94] sm:$0xf]
  %v97 = vld [vmem:[%s1 + $0x98] sm:$0xf]
  %v98 = vld [vmem:[%s1 + $0x9c] sm:$0xf]
  %v99 = vld [vmem:[%s1 + $0xa0] sm:$0xf]
  %v100 = vld [vmem:[%s1 + $0xa4] sm:$0xf]
  %v101 = vld [vmem:[%s1 + $0xa8] sm:$0xf]
  %v102 = vld [vmem:[%s1 + $0xac] sm:$0xf]
  %v103 = vld [vmem:[%s1 + $0xb0] sm:$0xf]
  %v104 = vld [vmem:[%s1 + $0xb4] sm:$0xf]
  %v105 = vld [vmem:[%s1 + $0xb8] sm:$0xf]
  %v106 = vld [vmem:[%s1 + $0xbc] sm:$0xf]
  %v107 = vld [vmem:[%s1 + $0xc0] sm:$0xf]
  %v108 = vld [vmem:[%s1 + $0xc4] sm:$0xf]
  %v109 = vld [vmem:[%s1 + $0xc8] sm:$0xf]
  %v110 = vld [vmem:[%s1 + $0xcc] sm:$0xf]
  %v111 = vld [vmem:[%s1 + $0xd0] sm:$0xf]
  %v112 = vld [vmem:[%s1 + $0xd4] sm:$0xf]
  %v113 = vld [vmem:[%s1 + $0xd8] sm:$0xf]
  %v114 = vld [vmem:[%s1 + $0xdc] sm:$0xf]
  %v115 = vld [vmem:[%s1 + $0xe0] sm:$0xf]
  %v116 = vld [vmem:[%s1 + $0xe4] sm:$0xf]
  %v117 = vld [vmem:[%s1 + $0xe8] sm:$0xf]
  %v118 = vld [vmem:[%s1 + $0xec] sm:$0xf]
  %v119 = vld [vmem:[%s1 + $0xf0] sm:$0xf]
  %v120 = vld [vmem:[%s1 + $0xf4] sm:$0xf]
  %v121 = vld [vmem:[%s1 + $0xf8] sm:$0xf]
  %v122 = vld [vmem:[%s1 + $0xfc] sm:$0xf]
  %v123 = vld [vmem:[%s1 + $0x100] sm:$0xf]
  %v124 = vld [vmem:[%s1 + $0x104] sm:$0xf]
  %v125 = vld [vmem:[%s1 + $0x108] sm:$0xf]
  %v126 = vld [vmem:[%s1 + $0x10c] sm:$0xf]
  %v127 = vld [vmem:[%s1 + $0x110] sm:$0xf]
  %v128 = vld [vmem:[%s1 + $0x114] sm:$0xf]
  %v129 = vld [vmem:[%s1 + $0x118] sm:$0xf]
  %v130 = vld [vmem:[%s1 + $0x11c] sm:$0xf]
  %v131 = vld [vmem:[%s1 + $0x120] sm:$0xf]
  %v132 = vld [vmem:[%s1 + $0x124] sm:$0xf]
  %v133 = vld [vmem:[%s1 + $0x128] sm:$0xf]
  %v134 = vld [vmem:[%s1 + $0x12c] sm:$0xf]
  %v135 = vld [vmem:[%s1 + $0x130] sm:$0xf]
  %v136 = vld [vmem:[%s1 + $0x134] sm:$0xf]
  %v137 = vld [vmem:[%s1 + $0x138] sm:$0xf]
  %v138 = vld [vmem:[%s1 + $0x13c] sm:$0xf]
  %v139 = vld [vmem:[%s1 + $0x140] sm:$0xf]
  %v140 = vld [vmem:[%s1 + $0x144] sm:$0xf]
  %v141 = vld [vmem:[%s1 + $0x148] sm:$0xf]
  %v142 = vld [vmem:[%s1 + $0x14c] sm:$0xf]
  %v143 = vld [vmem:[%s1 + $0x150] sm:$0xf]
  %v144 = vld [vmem:[%s1 + $0x154] sm:$0xf]
  %v145 = vld [vmem:[%s1 + $0x158] sm:$0xf]
  %v146 = vld [vmem:[%s1 + $0x15c] sm:$0xf]
  %v147 = vld [vmem:[%s1 + $0x160] sm:$0xf]
  %v148 = vld [vmem:[%s1 + $0x164] sm:$0xf]
  %v149 = vld [vmem:[%s1 + $0x168] sm:$0xf]
  %v150 = vld [vmem:[%s1 + $0x16c] sm:$0xf]
  %v151 = vld [vmem:[%s1 + $0x170] sm:$0xf]
  %v152 = vld [vmem:[%s1 + $0x174] sm:$0xf]
  %v153 = vld [vmem:[%s1 + $0x178] sm:$0xf]
  %v154 = vld [vmem:[%s1 + $0x17c] sm:$0xf]
  %v155 = vld [vmem:[%s1 + $0x180] sm:$0xf]
  %v156 = vld [vmem:[%s1 + $0x184] sm:$0xf]
  %v157 = vld [vmem:[%s2] sm:$0x1]
  %v159 = vlaneseq
  %v160 = vshrl.u32 %v159, 7
  %v161 = vsub.s32 0, %v160
  %v162 = vrot.slane %v157, %v161
  %v172 = vunpack.c.l.b16 %v51
  %v173 = vunpack.c.h.b16 %v51
  %v174 = vunpack.c.l.b16 %v52
  %v175 = vunpack.c.h.b16 %v52
  %v176 = vunpack.c.l.b16 %v53
  %v177 = vunpack.c.h.b16 %v53
  %v178 = vunpack.c.l.b16 %v54
  %v179 = vunpack.c.l.b16 %v55
  %v180 = vunpack.c.h.b16 %v55
  %v181 = vunpack.c.l.b16 %v56
  %v182 = vunpack.c.h.b16 %v56
  %v183 = vunpack.c.l.b16 %v57
  %v184 = vunpack.c.h.b16 %v57
  %v185 = vunpack.c.l.b16 %v58
  %v186 = vpack.c.b16 %v179, %v172
  %v187 = vpack.c.b16 %v180, %v173
  %v188 = vpack.c.b16 %v181, %v174
  %v189 = vpack.c.b16 %v182, %v175
  %v190 = vpack.c.b16 %v183, %v176
  %v191 = vpack.c.b16 %v184, %v177
  %v192 = vpack.c.b16 %v185, %v178
  %v297 = vunpack.c.l.b16 %v59
  %v298 = vunpack.c.l.b16 %v60
  %v299 = vunpack.c.l.b16 %v61
  %v300 = vunpack.c.l.b16 %v62
  %v301 = vunpack.c.l.b16 %v63
  %v302 = vunpack.c.l.b16 %v64
  %v303 = vunpack.c.l.b16 %v65
  %v304 = vunpack.c.l.b16 %v66
  %v305 = vunpack.c.l.b16 %v67
  %v306 = vunpack.c.l.b16 %v68
  %v307 = vunpack.c.l.b16 %v69
  %v308 = vunpack.c.l.b16 %v70
  %v309 = vunpack.c.l.b16 %v71
  %v310 = vunpack.c.l.b16 %v72
  %v311 = vunpack.c.l.b16 %v73
  %v312 = vunpack.c.l.b16 %v74
  %v313 = vunpack.c.l.b16 %v75
  %v314 = vunpack.c.l.b16 %v76
  %v315 = vunpack.c.l.b16 %v77
  %v316 = vunpack.c.l.b16 %v78
  %v317 = vunpack.c.l.b16 %v79
  %v318 = vunpack.c.l.b16 %v80
  %v319 = vunpack.c.l.b16 %v81
  %v320 = vunpack.c.l.b16 %v82
  %v321 = vunpack.c.l.b16 %v83
  %v322 = vunpack.c.l.b16 %v84
  %v323 = vunpack.c.l.b16 %v85
  %v324 = vunpack.c.l.b16 %v86
  %v325 = vunpack.c.l.b16 %v87
  %v326 = vunpack.c.l.b16 %v88
  %v327 = vunpack.c.l.b16 %v89
  %v328 = vunpack.c.l.b16 %v90
  %v329 = vunpack.c.l.b16 %v91
  %v330 = vunpack.c.l.b16 %v92
  %v331 = vunpack.c.l.b16 %v93
  %v332 = vunpack.c.l.b16 %v94
  %v333 = vunpack.c.l.b16 %v95
  %v334 = vunpack.c.l.b16 %v96
  %v335 = vunpack.c.l.b16 %v97
  %v336 = vunpack.c.l.b16 %v98
  %v337 = vunpack.c.l.b16 %v99
  %v338 = vunpack.c.l.b16 %v100
  %v339 = vunpack.c.l.b16 %v101
  %v340 = vunpack.c.l.b16 %v102
  %v341 = vunpack.c.l.b16 %v103
  %v342 = vunpack.c.l.b16 %v104
  %v343 = vunpack.c.l.b16 %v105
  %v344 = vunpack.c.l.b16 %v106
  %v345 = vunpack.c.l.b16 %v107
  %v346 = vunpack.c.l.b16 %v108
  %v347 = vunpack.c.l.b16 %v109
  %v348 = vunpack.c.l.b16 %v110
  %v349 = vunpack.c.l.b16 %v111
  %v350 = vunpack.c.l.b16 %v112
  %v351 = vunpack.c.l.b16 %v113
  %v352 = vunpack.c.l.b16 %v114
  %v353 = vunpack.c.l.b16 %v115
  %v354 = vunpack.c.l.b16 %v116
  %v355 = vunpack.c.l.b16 %v117
  %v356 = vunpack.c.l.b16 %v118
  %v357 = vunpack.c.l.b16 %v119
  %v358 = vunpack.c.l.b16 %v120
  %v359 = vunpack.c.l.b16 %v121
  %v360 = vunpack.c.l.b16 %v122
  %v361 = vunpack.c.l.b16 %v123
  %v362 = vunpack.c.l.b16 %v124
  %v363 = vunpack.c.l.b16 %v125
  %v364 = vunpack.c.l.b16 %v126
  %v365 = vunpack.c.l.b16 %v127
  %v366 = vunpack.c.l.b16 %v128
  %v367 = vunpack.c.l.b16 %v129
  %v368 = vunpack.c.l.b16 %v130
  %v369 = vunpack.c.l.b16 %v131
  %v370 = vunpack.c.l.b16 %v132
  %v371 = vunpack.c.l.b16 %v133
  %v372 = vunpack.c.l.b16 %v134
  %v373 = vunpack.c.l.b16 %v135
  %v374 = vunpack.c.l.b16 %v136
  %v375 = vunpack.c.l.b16 %v137
  %v376 = vunpack.c.l.b16 %v138
  %v377 = vunpack.c.l.b16 %v139
  %v378 = vunpack.c.l.b16 %v140
  %v379 = vunpack.c.l.b16 %v141
  %v380 = vunpack.c.l.b16 %v142
  %v381 = vunpack.c.l.b16 %v143
  %v382 = vunpack.c.l.b16 %v144
  %v383 = vunpack.c.l.b16 %v145
  %v384 = vunpack.c.l.b16 %v146
  %v385 = vunpack.c.l.b16 %v147
  %v386 = vunpack.c.l.b16 %v148
  %v387 = vunpack.c.l.b16 %v149
  %v388 = vunpack.c.l.b16 %v150
  %v389 = vunpack.c.l.b16 %v151
  %v390 = vunpack.c.l.b16 %v152
  %v391 = vunpack.c.l.b16 %v153
  %v392 = vunpack.c.l.b16 %v154
  %v393 = vunpack.c.l.b16 %v155
  %v394 = vunpack.c.l.b16 %v156
  %v395 = vpack.c.b16 %v298, %v297
  %v396 = vpack.c.b16 %v300, %v299
  %v397 = vpack.c.b16 %v302, %v301
  %v398 = vpack.c.b16 %v304, %v303
  %v399 = vpack.c.b16 %v306, %v305
  %v400 = vpack.c.b16 %v308, %v307
  %v401 = vpack.c.b16 %v310, %v309
  %v402 = vpack.c.b16 %v312, %v311
  %v403 = vpack.c.b16 %v314, %v313
  %v404 = vpack.c.b16 %v316, %v315
  %v405 = vpack.c.b16 %v318, %v317
  %v406 = vpack.c.b16 %v320, %v319
  %v407 = vpack.c.b16 %v322, %v321
  %v408 = vpack.c.b16 %v324, %v323
  %v409 = vpack.c.b16 %v326, %v325
  %v410 = vpack.c.b16 %v328, %v327
  %v411 = vpack.c.b16 %v330, %v329
  %v412 = vpack.c.b16 %v332, %v331
  %v413 = vpack.c.b16 %v334, %v333
  %v414 = vpack.c.b16 %v336, %v335
  %v415 = vpack.c.b16 %v338, %v337
  %v416 = vpack.c.b16 %v340, %v339
  %v417 = vpack.c.b16 %v342, %v341
  %v418 = vpack.c.b16 %v344, %v343
  %v419 = vpack.c.b16 %v346, %v345
  %v420 = vpack.c.b16 %v348, %v347
  %v421 = vpack.c.b16 %v350, %v349
  %v422 = vpack.c.b16 %v352, %v351
  %v423 = vpack.c.b16 %v354, %v353
  %v424 = vpack.c.b16 %v356, %v355
  %v425 = vpack.c.b16 %v358, %v357
  %v426 = vpack.c.b16 %v360, %v359
  %v427 = vpack.c.b16 %v362, %v361
  %v428 = vpack.c.b16 %v364, %v363
  %v429 = vpack.c.b16 %v366, %v365
  %v430 = vpack.c.b16 %v368, %v367
  %v431 = vpack.c.b16 %v370, %v369
  %v432 = vpack.c.b16 %v372, %v371
  %v433 = vpack.c.b16 %v374, %v373
  %v434 = vpack.c.b16 %v376, %v375
  %v435 = vpack.c.b16 %v378, %v377
  %v436 = vpack.c.b16 %v380, %v379
  %v437 = vpack.c.b16 %v382, %v381
  %v438 = vpack.c.b16 %v384, %v383
  %v439 = vpack.c.b16 %v386, %v385
  %v440 = vpack.c.b16 %v388, %v387
  %v441 = vpack.c.b16 %v390, %v389
  %v442 = vpack.c.b16 %v392, %v391
  %v443 = vpack.c.b16 %v394, %v393
  %vm493 = vcmask 130048
  %v495 = vsel %vm493, %v192, 0
  %497 = vmatprep.subr.bf16.mxu0 0
  %498 = vmatpush1.bf16.msra.mxu0 %v395
  %499 = vmatprep.subr.bf16.mxu0 0
  %500 = vmatpush1.bf16.msra.mxu0 %v396
  %501 = vmatprep.subr.bf16.mxu0 0
  %502 = vmatpush1.bf16.msra.mxu0 %v397
  %503 = vmatprep.subr.bf16.mxu0 0
  %504 = vmatpush1.bf16.msra.mxu0 %v398
  %505 = vmatprep.subr.bf16.mxu0 0
  %506 = vmatpush1.bf16.msra.mxu0 %v399
  %507 = vmatprep.subr.bf16.mxu0 0
  %508 = vmatpush1.bf16.msra.mxu0 %v400
  %509 = vmatprep.subr.bf16.mxu0 0
  %510 = vmatpush1.bf16.msra.mxu0 %v401
  %511 = vmatprep.subr.bf16.mxu0 0
  %512 = vmatpush1.bf16.msra.mxu0 %v402
  %513 = vmatprep.subr.bf16.mxu0 0
  %514 = vmatpush1.bf16.msra.mxu0 %v403
  %515 = vmatprep.subr.bf16.mxu0 0
  %516 = vmatpush1.bf16.msra.mxu0 %v404
  %517 = vmatprep.subr.bf16.mxu0 0
  %518 = vmatpush1.bf16.msra.mxu0 %v405
  %519 = vmatprep.subr.bf16.mxu0 0
  %520 = vmatpush1.bf16.msra.mxu0 %v406
  %521 = vmatprep.subr.bf16.mxu0 0
  %522 = vmatpush1.bf16.msra.mxu0 %v407
  %523 = vmatprep.subr.bf16.mxu0 0
  %524 = vmatpush1.bf16.msra.mxu0 %v408
  %525 = vmatprep.subr.bf16.mxu0 0
  %526 = vmatpush1.bf16.msra.mxu0 %v409
  %527 = vmatprep.subr.bf16.mxu0 0
  %528 = vmatpush1.bf16.msra.mxu0 %v410
  %529 = vmatprep.mubr.bf16.mxu0 %v187
  %530 = vmatmul.mubr.bf16.gmra.mrb[0].mxu0 %v186
  %v531 = vpop.f32.mrb[0].mxu0
  %v532 = vadd.f32 %v162, %v531
  %v533 = vpop.f32.mrb[0].mxu0
  %v534 = vpop.f32.mrb[0].mxu0
  %v535 = vadd.f32 %v162, %v534
  %v536 = vpop.f32.mrb[0].mxu0
  %537 = vdwg.mxu0
  %538 = vmatprep.subr.bf16.mxu0 0
  %539 = vmatpush1.bf16.msra.mxu0 %v411
  %540 = vmatprep.subr.bf16.mxu0 0
  %541 = vmatpush1.bf16.msra.mxu0 %v412
  %542 = vmatprep.subr.bf16.mxu0 0
  %543 = vmatpush1.bf16.msra.mxu0 %v413
  %544 = vmatprep.subr.bf16.mxu0 0
  %545 = vmatpush1.bf16.msra.mxu0 %v414
  %546 = vmatprep.subr.bf16.mxu0 0
  %547 = vmatpush1.bf16.msra.mxu0 %v415
  %548 = vmatprep.subr.bf16.mxu0 0
  %549 = vmatpush1.bf16.msra.mxu0 %v416
  %550 = vmatprep.subr.bf16.mxu0 0
  %551 = vmatpush1.bf16.msra.mxu0 %v417
  %552 = vmatprep.subr.bf16.mxu0 0
  %553 = vmatpush1.bf16.msra.mxu0 %v418
  %554 = vmatprep.subr.bf16.mxu0 0
  %555 = vmatpush1.bf16.msra.mxu0 %v419
  %556 = vmatprep.subr.bf16.mxu0 0
  %557 = vmatpush1.bf16.msra.mxu0 %v420
  %558 = vmatprep.subr.bf16.mxu0 0
  %559 = vmatpush1.bf16.msra.mxu0 %v421
  %560 = vmatprep.subr.bf16.mxu0 0
  %561 = vmatpush1.bf16.msra.mxu0 %v422
  %562 = vmatprep.subr.bf16.mxu0 0
  %563 = vmatpush1.bf16.msra.mxu0 %v423
  %564 = vmatprep.subr.bf16.mxu0 0
  %565 = vmatpush1.bf16.msra.mxu0 %v424
  %566 = vmatprep.subr.bf16.mxu0 0
  %567 = vmatpush1.bf16.msra.mxu0 %v425
  %568 = vmatprep.subr.bf16.mxu0 0
  %569 = vmatpush1.bf16.msra.mxu0 %v426
  %570 = vmatprep.mubr.bf16.mxu0 %v189
  %571 = vmatmul.mubr.bf16.gmra.mrb[0].mxu0 %v188
  %v572 = vpop.f32.mrb[0].mxu0
  %v573 = vadd.f32 %v532, %v572
  %v574 = vpop.f32.mrb[0].mxu0
  %v575 = vpop.f32.mrb[0].mxu0
  %v576 = vadd.f32 %v535, %v575
  %v577 = vpop.f32.mrb[0].mxu0
  %578 = vdwg.mxu0
  %579 = vmatprep.subr.bf16.mxu0 0
  %580 = vmatpush1.bf16.msra.mxu0 %v427
  %581 = vmatprep.subr.bf16.mxu0 0
  %582 = vmatpush1.bf16.msra.mxu0 %v428
  %583 = vmatprep.subr.bf16.mxu0 0
  %584 = vmatpush1.bf16.msra.mxu0 %v429
  %585 = vmatprep.subr.bf16.mxu0 0
  %586 = vmatpush1.bf16.msra.mxu0 %v430
  %587 = vmatprep.subr.bf16.mxu0 0
  %588 = vmatpush1.bf16.msra.mxu0 %v431
  %589 = vmatprep.subr.bf16.mxu0 0
  %590 = vmatpush1.bf16.msra.mxu0 %v432
  %591 = vmatprep.subr.bf16.mxu0 0
  %592 = vmatpush1.bf16.msra.mxu0 %v433
  %593 = vmatprep.subr.bf16.mxu0 0
  %594 = vmatpush1.bf16.msra.mxu0 %v434
  %595 = vmatprep.subr.bf16.mxu0 0
  %596 = vmatpush1.bf16.msra.mxu0 %v435
  %597 = vmatprep.subr.bf16.mxu0 0
  %598 = vmatpush1.bf16.msra.mxu0 %v436
  %599 = vmatprep.subr.bf16.mxu0 0
  %600 = vmatpush1.bf16.msra.mxu0 %v437
  %601 = vmatprep.subr.bf16.mxu0 0
  %602 = vmatpush1.bf16.msra.mxu0 %v438
  %603 = vmatprep.subr.bf16.mxu0 0
  %604 = vmatpush1.bf16.msra.mxu0 %v439
  %605 = vmatprep.subr.bf16.mxu0 0
  %606 = vmatpush1.bf16.msra.mxu0 %v440
  %607 = vmatprep.subr.bf16.mxu0 0
  %608 = vmatpush1.bf16.msra.mxu0 %v441
  %609 = vmatprep.subr.bf16.mxu0 0
  %610 = vmatpush1.bf16.msra.mxu0 %v442
  %611 = vmatprep.mubr.bf16.mxu0 %v191
  %612 = vmatmul.mubr.bf16.gmra.mrb[0].mxu0 %v190
  %v613 = vpop.f32.mrb[0].mxu0
  %v614 = vadd.f32 %v573, %v613
  %v615 = vpop.f32.mrb[0].mxu0
  %v616 = vpop.f32.mrb[0].mxu0
  %v617 = vadd.f32 %v576, %v616
  %v618 = vpop.f32.mrb[0].mxu0
  %619 = vdwg.mxu0
  %620 = vmatprep.subr.bf16.mxu0 0
  %621 = vmatpush1.bf16.msra.mxu0 %v443
  %622 = vmatprep.subr.bf16.mxu0 0
  %623 = vmatpush1.bf16.msra.mxu0 0
  %624 = vmatprep.subr.bf16.mxu0 0
  %625 = vmatpush1.bf16.msra.mxu0 0
  %626 = vmatprep.subr.bf16.mxu0 0
  %627 = vmatpush1.bf16.msra.mxu0 0
  %628 = vmatprep.subr.bf16.mxu0 0
  %629 = vmatpush1.bf16.msra.mxu0 0
  %630 = vmatprep.subr.bf16.mxu0 0
  %631 = vmatpush1.bf16.msra.mxu0 0
  %632 = vmatprep.subr.bf16.mxu0 0
  %633 = vmatpush1.bf16.msra.mxu0 0
  %634 = vmatprep.subr.bf16.mxu0 0
  %635 = vmatpush1.bf16.msra.mxu0 0
  %636 = vmatprep.subr.bf16.mxu0 0
  %637 = vmatpush1.bf16.msra.mxu0 0
  %638 = vmatprep.subr.bf16.mxu0 0
  %639 = vmatpush1.bf16.msra.mxu0 0
  %640 = vmatprep.subr.bf16.mxu0 0
  %641 = vmatpush1.bf16.msra.mxu0 0
  %642 = vmatprep.subr.bf16.mxu0 0
  %643 = vmatpush1.bf16.msra.mxu0 0
  %644 = vmatprep.subr.bf16.mxu0 0
  %645 = vmatpush1.bf16.msra.mxu0 0
  %646 = vmatprep.subr.bf16.mxu0 0
  %647 = vmatpush1.bf16.msra.mxu0 0
  %648 = vmatprep.subr.bf16.mxu0 0
  %649 = vmatpush1.bf16.msra.mxu0 0
  %650 = vmatprep.subr.bf16.mxu0 0
  %651 = vmatpush1.bf16.msra.mxu0 0
  %652 = vmatprep.mubr.bf16.mxu0 0
  %653 = vmatmul.mubr.bf16.gmra.mrb[0].mxu0 %v495
  %v654 = vpop.f32.mrb[0].mxu0
  %v655 = vadd.f32 %v614, %v654
  %v656 = vpop.f32.mrb[0].mxu0
  %v657 = vpop.f32.mrb[0].mxu0
  %v658 = vadd.f32 %v617, %v657
  %v659 = vpop.f32.mrb[0].mxu0
  %660 = vdwg.mxu0
  %v661 = vmax.f32 %v655, 0.0
  %v662 = vmax.f32 %v658, 0.0
  %v663 = vpack.c.bf16 %v662, %v661
  %v664 = vld [vmem:[%s3] sm:$0xf]
  %v665 = vld [vmem:[%s3 + $0x4] sm:$0xf]
  %v666 = vld [vmem:[%s3 + $0x8] sm:$0xf]
  %v667 = vld [vmem:[%s3 + $0xc] sm:$0xf]
  %v668 = vld [vmem:[%s3 + $0x10] sm:$0xf]
  %v669 = vld [vmem:[%s3 + $0x14] sm:$0xf]
  %v670 = vld [vmem:[%s3 + $0x18] sm:$0xf]
  %v671 = vld [vmem:[%s3 + $0x1c] sm:$0xf]
  %v672 = vld [vmem:[%s3 + $0x20] sm:$0xf]
  %v673 = vld [vmem:[%s3 + $0x24] sm:$0xf]
  %v674 = vld [vmem:[%s3 + $0x28] sm:$0xf]
  %v675 = vld [vmem:[%s3 + $0x2c] sm:$0xf]
  %v676 = vld [vmem:[%s3 + $0x30] sm:$0xf]
  %v677 = vld [vmem:[%s3 + $0x34] sm:$0xf]
  %v678 = vld [vmem:[%s3 + $0x38] sm:$0xf]
  %v679 = vld [vmem:[%s3 + $0x3c] sm:$0xf]
  %v680 = vld [vmem:[%s4] sm:$0x1]
  %v682 = vlaneseq
  %v683 = vshrl.u32 %v682, 7
  %v684 = vsub.s32 0, %v683
  %v685 = vrot.slane %v680, %v684
  %v703 = vunpack.c.l.b16 %v664
  %v704 = vunpack.c.l.b16 %v665
  %v705 = vunpack.c.l.b16 %v666
  %v706 = vunpack.c.l.b16 %v667
  %v707 = vunpack.c.l.b16 %v668
  %v708 = vunpack.c.l.b16 %v669
  %v709 = vunpack.c.l.b16 %v670
  %v710 = vunpack.c.l.b16 %v671
  %v711 = vunpack.c.l.b16 %v672
  %v712 = vunpack.c.l.b16 %v673
  %v713 = vunpack.c.l.b16 %v674
  %v714 = vunpack.c.l.b16 %v675
  %v715 = vunpack.c.l.b16 %v676
  %v716 = vunpack.c.l.b16 %v677
  %v717 = vunpack.c.l.b16 %v678
  %v718 = vunpack.c.l.b16 %v679
  %v719 = vpack.c.b16 %v704, %v703
  %v720 = vpack.c.b16 %v706, %v705
  %v721 = vpack.c.b16 %v708, %v707
  %v722 = vpack.c.b16 %v710, %v709
  %v723 = vpack.c.b16 %v712, %v711
  %v724 = vpack.c.b16 %v714, %v713
  %v725 = vpack.c.b16 %v716, %v715
  %v726 = vpack.c.b16 %v718, %v717
  %735 = vmatprep.subr.bf16.mxu0 0
  %736 = vmatpush1.bf16.msra.mxu0 %v719
  %737 = vmatprep.subr.bf16.mxu0 0
  %738 = vmatpush1.bf16.msra.mxu0 %v720
  %739 = vmatprep.subr.bf16.mxu0 0
  %740 = vmatpush1.bf16.msra.mxu0 %v721
  %741 = vmatprep.subr.bf16.mxu0 0
  %742 = vmatpush1.bf16.msra.mxu0 %v722
  %743 = vmatprep.subr.bf16.mxu0 0
  %744 = vmatpush1.bf16.msra.mxu0 %v723
  %745 = vmatprep.subr.bf16.mxu0 0
  %746 = vmatpush1.bf16.msra.mxu0 %v724
  %747 = vmatprep.subr.bf16.mxu0 0
  %748 = vmatpush1.bf16.msra.mxu0 %v725
  %749 = vmatprep.subr.bf16.mxu0 0
  %750 = vmatpush1.bf16.msra.mxu0 %v726
  %751 = vmatprep.subr.bf16.mxu0 0
  %752 = vmatpush1.bf16.msra.mxu0 0
  %753 = vmatprep.subr.bf16.mxu0 0
  %754 = vmatpush1.bf16.msra.mxu0 0
  %755 = vmatprep.subr.bf16.mxu0 0
  %756 = vmatpush1.bf16.msra.mxu0 0
  %757 = vmatprep.subr.bf16.mxu0 0
  %758 = vmatpush1.bf16.msra.mxu0 0
  %759 = vmatprep.subr.bf16.mxu0 0
  %760 = vmatpush1.bf16.msra.mxu0 0
  %761 = vmatprep.subr.bf16.mxu0 0
  %762 = vmatpush1.bf16.msra.mxu0 0
  %763 = vmatprep.subr.bf16.mxu0 0
  %764 = vmatpush1.bf16.msra.mxu0 0
  %765 = vmatprep.subr.bf16.mxu0 0
  %766 = vmatpush1.bf16.msra.mxu0 0
  %767 = vmatprep.mubr.bf16.mxu0 0
  %768 = vmatmul.mubr.bf16.gmra.mrb[0].mxu0 %v663
  %v769 = vpop.f32.mrb[0].mxu0
  %v770 = vadd.f32 %v685, %v769
  %v771 = vpop.f32.mrb[0].mxu0
  %v772 = vpop.f32.mrb[0].mxu0
  %v773 = vadd.f32 %v685, %v772
  %v774 = vpop.f32.mrb[0].mxu0
  %775 = vdwg.mxu0
  %v776 = vmax.f32 %v770, 0.0
  %v777 = vmax.f32 %v773, 0.0
  %v778 = vpack.c.bf16 %v777, %v776
  %v779 = vld [vmem:[%s5] sm:$0xf]
  %v780 = vld [vmem:[%s5 + $0x4] sm:$0xf]
  %v781 = vld [vmem:[%s5 + $0x8] sm:$0xf]
  %v782 = vld [vmem:[%s5 + $0xc] sm:$0xf]
  %v783 = vld [vmem:[%s5 + $0x10] sm:$0xf]
  %v784 = vld [vmem:[%s5 + $0x14] sm:$0xf]
  %v785 = vld [vmem:[%s5 + $0x18] sm:$0xf]
  %v786 = vld [vmem:[%s5 + $0x1c] sm:$0xf]
  %v787 = vld [vmem:[%s6] sm:$0x1]
  %v789 = vlaneseq
  %v790 = vshrl.u32 %v789, 7
  %v791 = vsub.s32 0, %v790
  %v792 = vrot.slane %v787, %v791
  %v802 = vunpack.c.l.b16 %v779
  %v803 = vunpack.c.l.b16 %v780
  %v804 = vunpack.c.l.b16 %v781
  %v805 = vunpack.c.l.b16 %v782
  %v806 = vunpack.c.l.b16 %v783
  %v807 = vunpack.c.l.b16 %v784
  %v808 = vunpack.c.l.b16 %v785
  %v809 = vunpack.c.l.b16 %v786
  %v810 = vpack.c.b16 %v803, %v802
  %v811 = vpack.c.b16 %v805, %v804
  %v812 = vpack.c.b16 %v807, %v806
  %v813 = vpack.c.b16 %v809, %v808
  %vm818 = vcmask 523264
  %v820 = vsel %vm818, %v778, 0
  %822 = vmatprep.subr.bf16.mxu0 0
  %823 = vmatpush1.bf16.msra.mxu0 %v810
  %824 = vmatprep.subr.bf16.mxu0 0
  %825 = vmatpush1.bf16.msra.mxu0 %v811
  %826 = vmatprep.subr.bf16.mxu0 0
  %827 = vmatpush1.bf16.msra.mxu0 %v812
  %828 = vmatprep.subr.bf16.mxu0 0
  %829 = vmatpush1.bf16.msra.mxu0 %v813
  %830 = vmatprep.subr.bf16.mxu0 0
  %831 = vmatpush1.bf16.msra.mxu0 0
  %832 = vmatprep.subr.bf16.mxu0 0
  %833 = vmatpush1.bf16.msra.mxu0 0
  %834 = vmatprep.subr.bf16.mxu0 0
  %835 = vmatpush1.bf16.msra.mxu0 0
  %836 = vmatprep.subr.bf16.mxu0 0
  %837 = vmatpush1.bf16.msra.mxu0 0
  %838 = vmatprep.subr.bf16.mxu0 0
  %839 = vmatpush1.bf16.msra.mxu0 0
  %840 = vmatprep.subr.bf16.mxu0 0
  %841 = vmatpush1.bf16.msra.mxu0 0
  %842 = vmatprep.subr.bf16.mxu0 0
  %843 = vmatpush1.bf16.msra.mxu0 0
  %844 = vmatprep.subr.bf16.mxu0 0
  %845 = vmatpush1.bf16.msra.mxu0 0
  %846 = vmatprep.subr.bf16.mxu0 0
  %847 = vmatpush1.bf16.msra.mxu0 0
  %848 = vmatprep.subr.bf16.mxu0 0
  %849 = vmatpush1.bf16.msra.mxu0 0
  %850 = vmatprep.subr.bf16.mxu0 0
  %851 = vmatpush1.bf16.msra.mxu0 0
  %852 = vmatprep.subr.bf16.mxu0 0
  %853 = vmatpush1.bf16.msra.mxu0 0
  %854 = vmatprep.mubr.bf16.mxu0 0
  %855 = vmatmul.mubr.bf16.gmra.mrb[0].mxu0 %v820
  %v856 = vpop.f32.mrb[0].mxu0
  %v857 = vadd.f32 %v792, %v856
  %v858 = vpop.f32.mrb[0].mxu0
  %v859 = vpop.f32.mrb[0].mxu0
  %v860 = vadd.f32 %v792, %v859
  %v861 = vpop.f32.mrb[0].mxu0
  %862 = vdwg.mxu0
  %v863 = vmax.f32 %v857, 0.0
  %v864 = vmax.f32 %v860, 0.0
  %v865 = vpack.c.bf16 %v864, %v863
  %v866 = vld [vmem:[%s7] sm:$0xf]
  %v867 = vld [vmem:[%s7 + $0x4] sm:$0x3]
  %v868 = vld [vmem:[%s8] sm:$0x1]
  %v870 = vlaneseq
  %v871 = vshrl.u32 %v870, 7
  %v872 = vsub.s32 0, %v871
  %v873 = vrot.slane %v868, %v872
  %v877 = vunpack.c.l.b16 %v866
  %v878 = vunpack.c.l.b16 %v867
  %v879 = vpack.c.b16 %v878, %v877
  %vm880 = vcmask 97280
  %v882 = vsel %vm880, %v865, 0
  %vm884 = vcmask 1045504
  %v886 = vsel %vm884, %v879, 0
  %888 = vmatprep.subr.bf16.mxu0 0
  %889 = vmatpush1.bf16.msra.mxu0 %v886
  %890 = vmatprep.subr.bf16.mxu0 0
  %891 = vmatpush1.bf16.msra.mxu0 0
  %892 = vmatprep.subr.bf16.mxu0 0
  %893 = vmatpush1.bf16.msra.mxu0 0
  %894 = vmatprep.subr.bf16.mxu0 0
  %895 = vmatpush1.bf16.msra.mxu0 0
  %896 = vmatprep.subr.bf16.mxu0 0
  %897 = vmatpush1.bf16.msra.mxu0 0
  %898 = vmatprep.subr.bf16.mxu0 0
  %899 = vmatpush1.bf16.msra.mxu0 0
  %900 = vmatprep.subr.bf16.mxu0 0
  %901 = vmatpush1.bf16.msra.mxu0 0
  %902 = vmatprep.subr.bf16.mxu0 0
  %903 = vmatpush1.bf16.msra.mxu0 0
  %904 = vmatprep.subr.bf16.mxu0 0
  %905 = vmatpush1.bf16.msra.mxu0 0
  %906 = vmatprep.subr.bf16.mxu0 0
  %907 = vmatpush1.bf16.msra.mxu0 0
  %908 = vmatprep.subr.bf16.mxu0 0
  %909 = vmatpush1.bf16.msra.mxu0 0
  %910 = vmatprep.subr.bf16.mxu0 0
  %911 = vmatpush1.bf16.msra.mxu0 0
  %912 = vmatprep.subr.bf16.mxu0 0
  %913 = vmatpush1.bf16.msra.mxu0 0
  %914 = vmatprep.subr.bf16.mxu0 0
  %915 = vmatpush1.bf16.msra.mxu0 0
  %916 = vmatprep.subr.bf16.mxu0 0
  %917 = vmatpush1.bf16.msra.mxu0 0
  %918 = vmatprep.subr.bf16.mxu0 0
  %919 = vmatpush1.bf16.msra.mxu0 0
  %920 = vmatprep.mubr.bf16.mxu0 0
  %921 = vmatmul.mubr.bf16.gmra.mrb[0].mxu0 %v882
  %v922 = vpop.f32.mrb[0].mxu0
  %v923 = vadd.f32 %v873, %v922
  %v924 = vpop.f32.mrb[0].mxu0
  %v925 = vpop.f32.mrb[0].mxu0
  %v926 = vadd.f32 %v873, %v925
  %v927 = vpop.f32.mrb[0].mxu0
  %928 = vdwg.mxu0
  %v929 = vmax.f32 %v923, 0.0
  %v930 = vmax.f32 %v926, 0.0
  %v931 = vpack.c.bf16 %v930, %v929
  %v932 = vld [vmem:[%s9] sm:$0xf]
  %v933 = vld [vmem:[%s9 + $0x4] sm:$0x3]
  %v934 = vld [vmem:[%s10] sm:$0x1]
  %v936 = vlaneseq
  %v937 = vshrl.u32 %v936, 7
  %v938 = vsub.s32 0, %v937
  %v939 = vrot.slane %v934, %v938
  %v943 = vunpack.c.l.b16 %v932
  %v944 = vunpack.c.l.b16 %v933
  %v945 = vpack.c.b16 %v944, %v943
  %v947 = vsel %vm880, %v931, 0
  %v950 = vsel %vm884, %v945, 0
  %952 = vmatprep.subr.bf16.mxu0 0
  %953 = vmatpush1.bf16.msra.mxu0 %v950
  %954 = vmatprep.subr.bf16.mxu0 0
  %955 = vmatpush1.bf16.msra.mxu0 0
  %956 = vmatprep.subr.bf16.mxu0 0
  %957 = vmatpush1.bf16.msra.mxu0 0
  %958 = vmatprep.subr.bf16.mxu0 0
  %959 = vmatpush1.bf16.msra.mxu0 0
  %960 = vmatprep.subr.bf16.mxu0 0
  %961 = vmatpush1.bf16.msra.mxu0 0
  %962 = vmatprep.subr.bf16.mxu0 0
  %963 = vmatpush1.bf16.msra.mxu0 0
  %964 = vmatprep.subr.bf16.mxu0 0
  %965 = vmatpush1.bf16.msra.mxu0 0
  %966 = vmatprep.subr.bf16.mxu0 0
  %967 = vmatpush1.bf16.msra.mxu0 0
  %968 = vmatprep.subr.bf16.mxu0 0
  %969 = vmatpush1.bf16.msra.mxu0 0
  %970 = vmatprep.subr.bf16.mxu0 0
  %971 = vmatpush1.bf16.msra.mxu0 0
  %972 = vmatprep.subr.bf16.mxu0 0
  %973 = vmatpush1.bf16.msra.mxu0 0
  %974 = vmatprep.subr.bf16.mxu0 0
  %975 = vmatpush1.bf16.msra.mxu0 0
  %976 = vmatprep.subr.bf16.mxu0 0
  %977 = vmatpush1.bf16.msra.mxu0 0
  %978 = vmatprep.subr.bf16.mxu0 0
  %979 = vmatpush1.bf16.msra.mxu0 0
  %980 = vmatprep.subr.bf16.mxu0 0
  %981 = vmatpush1.bf16.msra.mxu0 0
  %982 = vmatprep.subr.bf16.mxu0 0
  %983 = vmatpush1.bf16.msra.mxu0 0
  %984 = vmatprep.mubr.bf16.mxu0 0
  %985 = vmatmul.mubr.bf16.gmra.mrb[0].mxu0 %v947
  %v986 = vpop.f32.mrb[0].mxu0
  %v987 = vadd.f32 %v939, %v986
  %v988 = vpop.f32.mrb[0].mxu0
  %v989 = vpop.f32.mrb[0].mxu0
  %v990 = vadd.f32 %v939, %v989
  %v991 = vpop.f32.mrb[0].mxu0
  %992 = vdwg.mxu0
  %v993 = vmax.f32 %v987, 0.0
  %v994 = vmax.f32 %v990, 0.0
  %v995 = vpack.c.bf16 %v994, %v993
  %v996 = vld [vmem:[%s11] sm:$0xf]
  %v997 = vld [vmem:[%s11 + $0x4] sm:$0xf]
  %v998 = vld [vmem:[%s11 + $0x8] sm:$0xf]
  %v999 = vld [vmem:[%s11 + $0xc] sm:$0xf]
  %v1000 = vld [vmem:[%s11 + $0x10] sm:$0xf]
  %v1001 = vld [vmem:[%s11 + $0x14] sm:$0xf]
  %v1002 = vld [vmem:[%s11 + $0x18] sm:$0xf]
  %v1003 = vld [vmem:[%s11 + $0x1c] sm:$0xf]
  %v1004 = vld [vmem:[%s12] sm:$0x1]
  %v1006 = vlaneseq
  %v1007 = vshrl.u32 %v1006, 7
  %v1008 = vsub.s32 0, %v1007
  %v1009 = vrot.slane %v1004, %v1008
  %v1019 = vunpack.c.l.b16 %v996
  %v1020 = vunpack.c.l.b16 %v997
  %v1021 = vunpack.c.l.b16 %v998
  %v1022 = vunpack.c.l.b16 %v999
  %v1023 = vunpack.c.l.b16 %v1000
  %v1024 = vunpack.c.l.b16 %v1001
  %v1025 = vunpack.c.l.b16 %v1002
  %v1026 = vunpack.c.l.b16 %v1003
  %v1027 = vpack.c.b16 %v1020, %v1019
  %v1028 = vpack.c.b16 %v1022, %v1021
  %v1029 = vpack.c.b16 %v1024, %v1023
  %v1030 = vpack.c.b16 %v1026, %v1025
  %v1036 = vsel %vm818, %v995, 0
  %1038 = vmatprep.subr.bf16.mxu0 0
  %1039 = vmatpush1.bf16.msra.mxu0 %v1027
  %1040 = vmatprep.subr.bf16.mxu0 0
  %1041 = vmatpush1.bf16.msra.mxu0 %v1028
  %1042 = vmatprep.subr.bf16.mxu0 0
  %1043 = vmatpush1.bf16.msra.mxu0 %v1029
  %1044 = vmatprep.subr.bf16.mxu0 0
  %1045 = vmatpush1.bf16.msra.mxu0 %v1030
  %1046 = vmatprep.subr.bf16.mxu0 0
  %1047 = vmatpush1.bf16.msra.mxu0 0
  %1048 = vmatprep.subr.bf16.mxu0 0
  %1049 = vmatpush1.bf16.msra.mxu0 0
  %1050 = vmatprep.subr.bf16.mxu0 0
  %1051 = vmatpush1.bf16.msra.mxu0 0
  %1052 = vmatprep.subr.bf16.mxu0 0
  %1053 = vmatpush1.bf16.msra.mxu0 0
  %1054 = vmatprep.subr.bf16.mxu0 0
  %1055 = vmatpush1.bf16.msra.mxu0 0
  %1056 = vmatprep.subr.bf16.mxu0 0
  %1057 = vmatpush1.bf16.msra.mxu0 0
  %1058 = vmatprep.subr.bf16.mxu0 0
  %1059 = vmatpush1.bf16.msra.mxu0 0
  %1060 = vmatprep.subr.bf16.mxu0 0
  %1061 = vmatpush1.bf16.msra.mxu0 0
  %1062 = vmatprep.subr.bf16.mxu0 0
  %1063 = vmatpush1.bf16.msra.mxu0 0
  %1064 = vmatprep.subr.bf16.mxu0 0
  %1065 = vmatpush1.bf16.msra.mxu0 0
  %1066 = vmatprep.subr.bf16.mxu0 0
  %1067 = vmatpush1.bf16.msra.mxu0 0
  %1068 = vmatprep.subr.bf16.mxu0 0
  %1069 = vmatpush1.bf16.msra.mxu0 0
  %1070 = vmatprep.mubr.bf16.mxu0 0
  %1071 = vmatmul.mubr.bf16.gmra.mrb[0].mxu0 %v1036
  %v1072 = vpop.f32.mrb[0].mxu0
  %v1073 = vadd.f32 %v1009, %v1072
  %v1074 = vpop.f32.mrb[0].mxu0
  %v1075 = vpop.f32.mrb[0].mxu0
  %v1076 = vadd.f32 %v1009, %v1075
  %v1077 = vpop.f32.mrb[0].mxu0
  %1078 = vdwg.mxu0
  %v1079 = vmax.f32 %v1073, 0.0
  %v1080 = vmax.f32 %v1076, 0.0
  %v1081 = vpack.c.bf16 %v1080, %v1079
  %v1082 = vld [vmem:[%s13] sm:$0xff]
  %v1083 = vld [vmem:[%s13 + $0x8] sm:$0xff]
  %v1084 = vld [vmem:[%s13 + $0x10] sm:$0xff]
  %v1085 = vld [vmem:[%s13 + $0x18] sm:$0xf]
  %v1086 = vld [vmem:[%s13 + $0x1c] sm:$0xff]
  %v1087 = vld [vmem:[%s13 + $0x24] sm:$0xff]
  %v1088 = vld [vmem:[%s13 + $0x2c] sm:$0xff]
  %v1089 = vld [vmem:[%s13 + $0x34] sm:$0xf]
  %v1090 = vld [vmem:[%s13 + $0x38] sm:$0xff]
  %v1091 = vld [vmem:[%s13 + $0x40] sm:$0xff]
  %v1092 = vld [vmem:[%s13 + $0x48] sm:$0xff]
  %v1093 = vld [vmem:[%s13 + $0x50] sm:$0xf]
  %v1094 = vld [vmem:[%s13 + $0x54] sm:$0xff]
  %v1095 = vld [vmem:[%s13 + $0x5c] sm:$0xff]
  %v1096 = vld [vmem:[%s13 + $0x64] sm:$0xff]
  %v1097 = vld [vmem:[%s13 + $0x6c] sm:$0xf]
  %v1098 = vld [vmem:[%s13 + $0x70] sm:$0xff]
  %v1099 = vld [vmem:[%s13 + $0x78] sm:$0xff]
  %v1100 = vld [vmem:[%s13 + $0x80] sm:$0xff]
  %v1101 = vld [vmem:[%s13 + $0x88] sm:$0xf]
  %v1102 = vld [vmem:[%s13 + $0x8c] sm:$0xff]
  %v1103 = vld [vmem:[%s13 + $0x94] sm:$0xff]
  %v1104 = vld [vmem:[%s13 + $0x9c] sm:$0xff]
  %v1105 = vld [vmem:[%s13 + $0xa4] sm:$0xf]
  %v1106 = vld [vmem:[%s13 + $0xa8] sm:$0xff]
  %v1107 = vld [vmem:[%s13 + $0xb0] sm:$0xff]
  %v1108 = vld [vmem:[%s13 + $0xb8] sm:$0xff]
  %v1109 = vld [vmem:[%s13 + $0xc0] sm:$0xf]
  %v1110 = vld [vmem:[%s13 + $0xc4] sm:$0xff]
  %v1111 = vld [vmem:[%s13 + $0xcc] sm:$0xff]
  %v1112 = vld [vmem:[%s13 + $0xd4] sm:$0xff]
  %v1113 = vld [vmem:[%s13 + $0xdc] sm:$0xf]
  %v1114 = vld [vmem:[%s13 + $0xe0] sm:$0xff]
  %v1115 = vld [vmem:[%s13 + $0xe8] sm:$0xff]
  %v1116 = vld [vmem:[%s13 + $0xf0] sm:$0xff]
  %v1117 = vld [vmem:[%s13 + $0xf8] sm:$0xf]
  %v1118 = vld [vmem:[%s13 + $0xfc] sm:$0xff]
  %v1119 = vld [vmem:[%s13 + $0x104] sm:$0xff]
  %v1120 = vld [vmem:[%s13 + $0x10c] sm:$0xff]
  %v1121 = vld [vmem:[%s13 + $0x114] sm:$0xf]
  %v1122 = vld [vmem:[%s13 + $0x118] sm:$0xff]
  %v1123 = vld [vmem:[%s13 + $0x120] sm:$0xff]
  %v1124 = vld [vmem:[%s13 + $0x128] sm:$0xff]
  %v1125 = vld [vmem:[%s13 + $0x130] sm:$0xf]
  %v1126 = vld [vmem:[%s13 + $0x134] sm:$0xff]
  %v1127 = vld [vmem:[%s13 + $0x13c] sm:$0xff]
  %v1128 = vld [vmem:[%s13 + $0x144] sm:$0xff]
  %v1129 = vld [vmem:[%s13 + $0x14c] sm:$0xf]
  %v1130 = vld [vmem:[%s13 + $0x150] sm:$0xff]
  %v1131 = vld [vmem:[%s13 + $0x158] sm:$0xff]
  %v1132 = vld [vmem:[%s13 + $0x160] sm:$0xff]
  %v1133 = vld [vmem:[%s13 + $0x168] sm:$0xf]
  %v1134 = vld [vmem:[%s13 + $0x16c] sm:$0xff]
  %v1135 = vld [vmem:[%s13 + $0x174] sm:$0xff]
  %v1136 = vld [vmem:[%s13 + $0x17c] sm:$0xff]
  %v1137 = vld [vmem:[%s13 + $0x184] sm:$0xf]
  %v1138 = vld [vmem:[%s13 + $0x188] sm:$0xff]
  %v1139 = vld [vmem:[%s13 + $0x190] sm:$0xff]
  %v1140 = vld [vmem:[%s13 + $0x198] sm:$0xff]
  %v1141 = vld [vmem:[%s13 + $0x1a0] sm:$0xf]
  %v1142 = vld [vmem:[%s13 + $0x1a4] sm:$0xff]
  %v1143 = vld [vmem:[%s13 + $0x1ac] sm:$0xff]
  %v1144 = vld [vmem:[%s13 + $0x1b4] sm:$0xff]
  %v1145 = vld [vmem:[%s13 + $0x1bc] sm:$0xf]
  %v1146 = vld [vmem:[%s14] sm:$0x7f]
  %v1148 = vlaneseq
  %v1149 = vshrl.u32 %v1148, 7
  %v1150 = vsub.s32 0, %v1149
  %v1151 = vrot.slane %v1146, %v1150
  %v1152 = vlaneseq
  %v1153 = vshrl.u32 %v1152, 7
  %v1154 = vsub.s32 1, %v1153
  %v1155 = vrot.slane %v1146, %v1154
  %v1156 = vlaneseq
  %v1157 = vshrl.u32 %v1156, 7
  %v1158 = vsub.s32 2, %v1157
  %v1159 = vrot.slane %v1146, %v1158
  %v1160 = vlaneseq
  %v1161 = vshrl.u32 %v1160, 7
  %v1162 = vsub.s32 3, %v1161
  %v1163 = vrot.slane %v1146, %v1162
  %v1164 = vlaneseq
  %v1165 = vshrl.u32 %v1164, 7
  %v1166 = vsub.s32 4, %v1165
  %v1167 = vrot.slane %v1146, %v1166
  %v1168 = vlaneseq
  %v1169 = vshrl.u32 %v1168, 7
  %v1170 = vsub.s32 5, %v1169
  %v1171 = vrot.slane %v1146, %v1170
  %v1172 = vlaneseq
  %v1173 = vshrl.u32 %v1172, 7
  %v1174 = vsub.s32 6, %v1173
  %v1175 = vrot.slane %v1146, %v1174
  %v1247 = vunpack.c.l.b16 %v1082
  %v1248 = vunpack.c.h.b16 %v1082
  %v1249 = vunpack.c.l.b16 %v1083
  %v1250 = vunpack.c.h.b16 %v1083
  %v1251 = vunpack.c.l.b16 %v1084
  %v1252 = vunpack.c.h.b16 %v1084
  %v1253 = vunpack.c.l.b16 %v1085
  %v1254 = vunpack.c.l.b16 %v1086
  %v1255 = vunpack.c.h.b16 %v1086
  %v1256 = vunpack.c.l.b16 %v1087
  %v1257 = vunpack.c.h.b16 %v1087
  %v1258 = vunpack.c.l.b16 %v1088
  %v1259 = vunpack.c.h.b16 %v1088
  %v1260 = vunpack.c.l.b16 %v1089
  %v1261 = vunpack.c.l.b16 %v1090
  %v1262 = vunpack.c.h.b16 %v1090
  %v1263 = vunpack.c.l.b16 %v1091
  %v1264 = vunpack.c.h.b16 %v1091
  %v1265 = vunpack.c.l.b16 %v1092
  %v1266 = vunpack.c.h.b16 %v1092
  %v1267 = vunpack.c.l.b16 %v1093
  %v1268 = vunpack.c.l.b16 %v1094
  %v1269 = vunpack.c.h.b16 %v1094
  %v1270 = vunpack.c.l.b16 %v1095
  %v1271 = vunpack.c.h.b16 %v1095
  %v1272 = vunpack.c.l.b16 %v1096
  %v1273 = vunpack.c.h.b16 %v1096
  %v1274 = vunpack.c.l.b16 %v1097
  %v1275 = vunpack.c.l.b16 %v1098
  %v1276 = vunpack.c.h.b16 %v1098
  %v1277 = vunpack.c.l.b16 %v1099
  %v1278 = vunpack.c.h.b16 %v1099
  %v1279 = vunpack.c.l.b16 %v1100
  %v1280 = vunpack.c.h.b16 %v1100
  %v1281 = vunpack.c.l.b16 %v1101
  %v1282 = vunpack.c.l.b16 %v1102
  %v1283 = vunpack.c.h.b16 %v1102
  %v1284 = vunpack.c.l.b16 %v1103
  %v1285 = vunpack.c.h.b16 %v1103
  %v1286 = vunpack.c.l.b16 %v1104
  %v1287 = vunpack.c.h.b16 %v1104
  %v1288 = vunpack.c.l.b16 %v1105
  %v1289 = vunpack.c.l.b16 %v1106
  %v1290 = vunpack.c.h.b16 %v1106
  %v1291 = vunpack.c.l.b16 %v1107
  %v1292 = vunpack.c.h.b16 %v1107
  %v1293 = vunpack.c.l.b16 %v1108
  %v1294 = vunpack.c.h.b16 %v1108
  %v1295 = vunpack.c.l.b16 %v1109
  %v1296 = vunpack.c.l.b16 %v1110
  %v1297 = vunpack.c.h.b16 %v1110
  %v1298 = vunpack.c.l.b16 %v1111
  %v1299 = vunpack.c.h.b16 %v1111
  %v1300 = vunpack.c.l.b16 %v1112
  %v1301 = vunpack.c.h.b16 %v1112
  %v1302 = vunpack.c.l.b16 %v1113
  %v1303 = vunpack.c.l.b16 %v1114
  %v1304 = vunpack.c.h.b16 %v1114
  %v1305 = vunpack.c.l.b16 %v1115
  %v1306 = vunpack.c.h.b16 %v1115
  %v1307 = vunpack.c.l.b16 %v1116
  %v1308 = vunpack.c.h.b16 %v1116
  %v1309 = vunpack.c.l.b16 %v1117
  %v1310 = vunpack.c.l.b16 %v1118
  %v1311 = vunpack.c.h.b16 %v1118
  %v1312 = vunpack.c.l.b16 %v1119
  %v1313 = vunpack.c.h.b16 %v1119
  %v1314 = vunpack.c.l.b16 %v1120
  %v1315 = vunpack.c.h.b16 %v1120
  %v1316 = vunpack.c.l.b16 %v1121
  %v1317 = vunpack.c.l.b16 %v1122
  %v1318 = vunpack.c.h.b16 %v1122
  %v1319 = vunpack.c.l.b16 %v1123
  %v1320 = vunpack.c.h.b16 %v1123
  %v1321 = vunpack.c.l.b16 %v1124
  %v1322 = vunpack.c.h.b16 %v1124
  %v1323 = vunpack.c.l.b16 %v1125
  %v1324 = vunpack.c.l.b16 %v1126
  %v1325 = vunpack.c.h.b16 %v1126
  %v1326 = vunpack.c.l.b16 %v1127
  %v1327 = vunpack.c.h.b16 %v1127
  %v1328 = vunpack.c.l.b16 %v1128
  %v1329 = vunpack.c.h.b16 %v1128
  %v1330 = vunpack.c.l.b16 %v1129
  %v1331 = vunpack.c.l.b16 %v1130
  %v1332 = vunpack.c.h.b16 %v1130
  %v1333 = vunpack.c.l.b16 %v1131
  %v1334 = vunpack.c.h.b16 %v1131
  %v1335 = vunpack.c.l.b16 %v1132
  %v1336 = vunpack.c.h.b16 %v1132
  %v1337 = vunpack.c.l.b16 %v1133
  %v1338 = vunpack.c.l.b16 %v1134
  %v1339 = vunpack.c.h.b16 %v1134
  %v1340 = vunpack.c.l.b16 %v1135
  %v1341 = vunpack.c.h.b16 %v1135
  %v1342 = vunpack.c.l.b16 %v1136
  %v1343 = vunpack.c.h.b16 %v1136
  %v1344 = vunpack.c.l.b16 %v1137
  %v1345 = vunpack.c.l.b16 %v1138
  %v1346 = vunpack.c.h.b16 %v1138
  %v1347 = vunpack.c.l.b16 %v1139
  %v1348 = vunpack.c.h.b16 %v1139
  %v1349 = vunpack.c.l.b16 %v1140
  %v1350 = vunpack.c.h.b16 %v1140
  %v1351 = vunpack.c.l.b16 %v1141
  %v1352 = vunpack.c.l.b16 %v1142
  %v1353 = vunpack.c.h.b16 %v1142
  %v1354 = vunpack.c.l.b16 %v1143
  %v1355 = vunpack.c.h.b16 %v1143
  %v1356 = vunpack.c.l.b16 %v1144
  %v1357 = vunpack.c.h.b16 %v1144
  %v1358 = vunpack.c.l.b16 %v1145
  %v1359 = vpack.c.b16 %v1254, %v1247
  %v1360 = vpack.c.b16 %v1255, %v1248
  %v1361 = vpack.c.b16 %v1256, %v1249
  %v1362 = vpack.c.b16 %v1257, %v1250
  %v1363 = vpack.c.b16 %v1258, %v1251
  %v1364 = vpack.c.b16 %v1259, %v1252
  %v1365 = vpack.c.b16 %v1260, %v1253
  %v1366 = vpack.c.b16 %v1268, %v1261
  %v1367 = vpack.c.b16 %v1269, %v1262
  %v1368 = vpack.c.b16 %v1270, %v1263
  %v1369 = vpack.c.b16 %v1271, %v1264
  %v1370 = vpack.c.b16 %v1272, %v1265
  %v1371 = vpack.c.b16 %v1273, %v1266
  %v1372 = vpack.c.b16 %v1274, %v1267
  %v1373 = vpack.c.b16 %v1282, %v1275
  %v1374 = vpack.c.b16 %v1283, %v1276
  %v1375 = vpack.c.b16 %v1284, %v1277
  %v1376 = vpack.c.b16 %v1285, %v1278
  %v1377 = vpack.c.b16 %v1286, %v1279
  %v1378 = vpack.c.b16 %v1287, %v1280
  %v1379 = vpack.c.b16 %v1288, %v1281
  %v1380 = vpack.c.b16 %v1296, %v1289
  %v1381 = vpack.c.b16 %v1297, %v1290
  %v1382 = vpack.c.b16 %v1298, %v1291
  %v1383 = vpack.c.b16 %v1299, %v1292
  %v1384 = vpack.c.b16 %v1300, %v1293
  %v1385 = vpack.c.b16 %v1301, %v1294
  %v1386 = vpack.c.b16 %v1302, %v1295
  %v1387 = vpack.c.b16 %v1310, %v1303
  %v1388 = vpack.c.b16 %v1311, %v1304
  %v1389 = vpack.c.b16 %v1312, %v1305
  %v1390 = vpack.c.b16 %v1313, %v1306
  %v1391 = vpack.c.b16 %v1314, %v1307
  %v1392 = vpack.c.b16 %v1315, %v1308
  %v1393 = vpack.c.b16 %v1316, %v1309
  %v1394 = vpack.c.b16 %v1324, %v1317
  %v1395 = vpack.c.b16 %v1325, %v1318
  %v1396 = vpack.c.b16 %v1326, %v1319
  %v1397 = vpack.c.b16 %v1327, %v1320
  %v1398 = vpack.c.b16 %v1328, %v1321
  %v1399 = vpack.c.b16 %v1329, %v1322
  %v1400 = vpack.c.b16 %v1330, %v1323
  %v1401 = vpack.c.b16 %v1338, %v1331
  %v1402 = vpack.c.b16 %v1339, %v1332
  %v1403 = vpack.c.b16 %v1340, %v1333
  %v1404 = vpack.c.b16 %v1341, %v1334
  %v1405 = vpack.c.b16 %v1342, %v1335
  %v1406 = vpack.c.b16 %v1343, %v1336
  %v1407 = vpack.c.b16 %v1344, %v1337
  %v1408 = vpack.c.b16 %v1352, %v1345
  %v1409 = vpack.c.b16 %v1353, %v1346
  %v1410 = vpack.c.b16 %v1354, %v1347
  %v1411 = vpack.c.b16 %v1355, %v1348
  %v1412 = vpack.c.b16 %v1356, %v1349
  %v1413 = vpack.c.b16 %v1357, %v1350
  %v1414 = vpack.c.b16 %v1358, %v1351
  %1471 = vmatprep.subr.bf16.mxu0 %v1360
  %1472 = vmatpush1.bf16.msra.mxu0 %v1359
  %1473 = vmatprep.subr.bf16.mxu0 %v1367
  %1474 = vmatpush1.bf16.msra.mxu0 %v1366
  %1475 = vmatprep.subr.bf16.mxu0 %v1374
  %1476 = vmatpush1.bf16.msra.mxu0 %v1373
  %1477 = vmatprep.subr.bf16.mxu0 %v1381
  %1478 = vmatpush1.bf16.msra.mxu0 %v1380
  %1479 = vmatprep.subr.bf16.mxu0 %v1388
  %1480 = vmatpush1.bf16.msra.mxu0 %v1387
  %1481 = vmatprep.subr.bf16.mxu0 %v1395
  %1482 = vmatpush1.bf16.msra.mxu0 %v1394
  %1483 = vmatprep.subr.bf16.mxu0 %v1402
  %1484 = vmatpush1.bf16.msra.mxu0 %v1401
  %1485 = vmatprep.subr.bf16.mxu0 %v1409
  %1486 = vmatpush1.bf16.msra.mxu0 %v1408
  %1487 = vmatprep.subr.bf16.mxu0 0
  %1488 = vmatpush1.bf16.msra.mxu0 0
  %1489 = vmatprep.subr.bf16.mxu0 0
  %1490 = vmatpush1.bf16.msra.mxu0 0
  %1491 = vmatprep.subr.bf16.mxu0 0
  %1492 = vmatpush1.bf16.msra.mxu0 0
  %1493 = vmatprep.subr.bf16.mxu0 0
  %1494 = vmatpush1.bf16.msra.mxu0 0
  %1495 = vmatprep.subr.bf16.mxu0 0
  %1496 = vmatpush1.bf16.msra.mxu0 0
  %1497 = vmatprep.subr.bf16.mxu0 0
  %1498 = vmatpush1.bf16.msra.mxu0 0
  %1499 = vmatprep.subr.bf16.mxu0 0
  %1500 = vmatpush1.bf16.msra.mxu0 0
  %1501 = vmatprep.subr.bf16.mxu0 0
  %1502 = vmatpush1.bf16.msra.mxu0 0
  %1503 = vmatprep.mubr.bf16.mxu0 0
  %1504 = vmatmul.mubr.bf16.gmra.mrb[0].mxu0 %v1081
  %v1505 = vpop.f32.mrb[0].mxu0
  %v1506 = vadd.f32 %v1151, %v1505
  %v1507 = vpop.f32.mrb[0].mxu0
  %v1508 = vadd.f32 %v1155, %v1507
  %v1509 = vpop.f32.mrb[0].mxu0
  %v1510 = vadd.f32 %v1151, %v1509
  %v1511 = vpop.f32.mrb[0].mxu0
  %v1512 = vadd.f32 %v1155, %v1511
  %1513 = vdwg.mxu0
  %1514 = vmatprep.subr.bf16.mxu0 %v1362
  %1515 = vmatpush1.bf16.msra.mxu0 %v1361
  %1516 = vmatprep.subr.bf16.mxu0 %v1369
  %1517 = vmatpush1.bf16.msra.mxu0 %v1368
  %1518 = vmatprep.subr.bf16.mxu0 %v1376
  %1519 = vmatpush1.bf16.msra.mxu0 %v1375
  %1520 = vmatprep.subr.bf16.mxu0 %v1383
  %1521 = vmatpush1.bf16.msra.mxu0 %v1382
  %1522 = vmatprep.subr.bf16.mxu0 %v1390
  %1523 = vmatpush1.bf16.msra.mxu0 %v1389
  %1524 = vmatprep.subr.bf16.mxu0 %v1397
  %1525 = vmatpush1.bf16.msra.mxu0 %v1396
  %1526 = vmatprep.subr.bf16.mxu0 %v1404
  %1527 = vmatpush1.bf16.msra.mxu0 %v1403
  %1528 = vmatprep.subr.bf16.mxu0 %v1411
  %1529 = vmatpush1.bf16.msra.mxu0 %v1410
  %1530 = vmatprep.subr.bf16.mxu0 0
  %1531 = vmatpush1.bf16.msra.mxu0 0
  %1532 = vmatprep.subr.bf16.mxu0 0
  %1533 = vmatpush1.bf16.msra.mxu0 0
  %1534 = vmatprep.subr.bf16.mxu0 0
  %1535 = vmatpush1.bf16.msra.mxu0 0
  %1536 = vmatprep.subr.bf16.mxu0 0
  %1537 = vmatpush1.bf16.msra.mxu0 0
  %1538 = vmatprep.subr.bf16.mxu0 0
  %1539 = vmatpush1.bf16.msra.mxu0 0
  %1540 = vmatprep.subr.bf16.mxu0 0
  %1541 = vmatpush1.bf16.msra.mxu0 0
  %1542 = vmatprep.subr.bf16.mxu0 0
  %1543 = vmatpush1.bf16.msra.mxu0 0
  %1544 = vmatprep.subr.bf16.mxu0 0
  %1545 = vmatpush1.bf16.msra.mxu0 0
  %1546 = vmatprep.mubr.bf16.mxu0 0
  %1547 = vmatmul.mubr.bf16.gmra.mrb[0].mxu0 %v1081
  %v1548 = vpop.f32.mrb[0].mxu0
  %v1549 = vadd.f32 %v1159, %v1548
  %v1550 = vpop.f32.mrb[0].mxu0
  %v1551 = vadd.f32 %v1163, %v1550
  %v1552 = vpop.f32.mrb[0].mxu0
  %v1553 = vadd.f32 %v1159, %v1552
  %v1554 = vpop.f32.mrb[0].mxu0
  %v1555 = vadd.f32 %v1163, %v1554
  %1556 = vdwg.mxu0
  %1557 = vmatprep.subr.bf16.mxu0 %v1364
  %1558 = vmatpush1.bf16.msra.mxu0 %v1363
  %1559 = vmatprep.subr.bf16.mxu0 %v1371
  %1560 = vmatpush1.bf16.msra.mxu0 %v1370
  %1561 = vmatprep.subr.bf16.mxu0 %v1378
  %1562 = vmatpush1.bf16.msra.mxu0 %v1377
  %1563 = vmatprep.subr.bf16.mxu0 %v1385
  %1564 = vmatpush1.bf16.msra.mxu0 %v1384
  %1565 = vmatprep.subr.bf16.mxu0 %v1392
  %1566 = vmatpush1.bf16.msra.mxu0 %v1391
  %1567 = vmatprep.subr.bf16.mxu0 %v1399
  %1568 = vmatpush1.bf16.msra.mxu0 %v1398
  %1569 = vmatprep.subr.bf16.mxu0 %v1406
  %1570 = vmatpush1.bf16.msra.mxu0 %v1405
  %1571 = vmatprep.subr.bf16.mxu0 %v1413
  %1572 = vmatpush1.bf16.msra.mxu0 %v1412
  %1573 = vmatprep.subr.bf16.mxu0 0
  %1574 = vmatpush1.bf16.msra.mxu0 0
  %1575 = vmatprep.subr.bf16.mxu0 0
  %1576 = vmatpush1.bf16.msra.mxu0 0
  %1577 = vmatprep.subr.bf16.mxu0 0
  %1578 = vmatpush1.bf16.msra.mxu0 0
  %1579 = vmatprep.subr.bf16.mxu0 0
  %1580 = vmatpush1.bf16.msra.mxu0 0
  %1581 = vmatprep.subr.bf16.mxu0 0
  %1582 = vmatpush1.bf16.msra.mxu0 0
  %1583 = vmatprep.subr.bf16.mxu0 0
  %1584 = vmatpush1.bf16.msra.mxu0 0
  %1585 = vmatprep.subr.bf16.mxu0 0
  %1586 = vmatpush1.bf16.msra.mxu0 0
  %1587 = vmatprep.subr.bf16.mxu0 0
  %1588 = vmatpush1.bf16.msra.mxu0 0
  %1589 = vmatprep.mubr.bf16.mxu0 0
  %1590 = vmatmul.mubr.bf16.gmra.mrb[0].mxu0 %v1081
  %v1591 = vpop.f32.mrb[0].mxu0
  %v1592 = vadd.f32 %v1167, %v1591
  %v1593 = vpop.f32.mrb[0].mxu0
  %v1594 = vadd.f32 %v1171, %v1593
  %v1595 = vpop.f32.mrb[0].mxu0
  %v1596 = vadd.f32 %v1167, %v1595
  %v1597 = vpop.f32.mrb[0].mxu0
  %v1598 = vadd.f32 %v1171, %v1597
  %1599 = vdwg.mxu0
  %1600 = vmatprep.subr.bf16.mxu0 0
  %1601 = vmatpush1.bf16.msra.mxu0 %v1365
  %1602 = vmatprep.subr.bf16.mxu0 0
  %1603 = vmatpush1.bf16.msra.mxu0 %v1372
  %1604 = vmatprep.subr.bf16.mxu0 0
  %1605 = vmatpush1.bf16.msra.mxu0 %v1379
  %1606 = vmatprep.subr.bf16.mxu0 0
  %1607 = vmatpush1.bf16.msra.mxu0 %v1386
  %1608 = vmatprep.subr.bf16.mxu0 0
  %1609 = vmatpush1.bf16.msra.mxu0 %v1393
  %1610 = vmatprep.subr.bf16.mxu0 0
  %1611 = vmatpush1.bf16.msra.mxu0 %v1400
  %1612 = vmatprep.subr.bf16.mxu0 0
  %1613 = vmatpush1.bf16.msra.mxu0 %v1407
  %1614 = vmatprep.subr.bf16.mxu0 0
  %1615 = vmatpush1.bf16.msra.mxu0 %v1414
  %1616 = vmatprep.subr.bf16.mxu0 0
  %1617 = vmatpush1.bf16.msra.mxu0 0
  %1618 = vmatprep.subr.bf16.mxu0 0
  %1619 = vmatpush1.bf16.msra.mxu0 0
  %1620 = vmatprep.subr.bf16.mxu0 0
  %1621 = vmatpush1.bf16.msra.mxu0 0
  %1622 = vmatprep.subr.bf16.mxu0 0
  %1623 = vmatpush1.bf16.msra.mxu0 0
  %1624 = vmatprep.subr.bf16.mxu0 0
  %1625 = vmatpush1.bf16.msra.mxu0 0
  %1626 = vmatprep.subr.bf16.mxu0 0
  %1627 = vmatpush1.bf16.msra.mxu0 0
  %1628 = vmatprep.subr.bf16.mxu0 0
  %1629 = vmatpush1.bf16.msra.mxu0 0
  %1630 = vmatprep.subr.bf16.mxu0 0
  %1631 = vmatpush1.bf16.msra.mxu0 0
  %1632 = vmatprep.mubr.bf16.mxu0 0
  %1633 = vmatmul.mubr.bf16.gmra.mrb[0].mxu0 %v1081
  %v1634 = vpop.f32.mrb[0].mxu0
  %v1635 = vadd.f32 %v1175, %v1634
  %v1636 = vpop.f32.mrb[0].mxu0
  %v1637 = vpop.f32.mrb[0].mxu0
  %v1638 = vadd.f32 %v1175, %v1637
  %v1639 = vpop.f32.mrb[0].mxu0
  %1640 = vdwg.mxu0
  %v1641 = vmul.f32 %v1506, 0.5
  %v1642 = vmul.f32 %v1508, 0.5
  %v1643 = vmul.f32 %v1549, 0.5
  %v1644 = vmul.f32 %v1551, 0.5
  %v1645 = vmul.f32 %v1592, 0.5
  %v1646 = vmul.f32 %v1594, 0.5
  %v1647 = vmul.f32 %v1635, 0.5
  %v1648 = vmul.f32 %v1510, 0.5
  %v1649 = vmul.f32 %v1512, 0.5
  %v1650 = vmul.f32 %v1553, 0.5
  %v1651 = vmul.f32 %v1555, 0.5
  %v1652 = vmul.f32 %v1596, 0.5
  %v1653 = vmul.f32 %v1598, 0.5
  %v1654 = vmul.f32 %v1638, 0.5
  %v1655 = vtanh.pop %v1641
  %v1656 = vtanh.pop %v1642
  %v1657 = vtanh.pop %v1643
  %v1658 = vtanh.pop %v1644
  %v1659 = vtanh.pop %v1645
  %v1660 = vtanh.pop %v1646
  %v1661 = vtanh.pop %v1647
  %v1662 = vtanh.pop %v1648
  %v1663 = vtanh.pop %v1649
  %v1664 = vtanh.pop %v1650
  %v1665 = vtanh.pop %v1651
  %v1666 = vtanh.pop %v1652
  %v1667 = vtanh.pop %v1653
  %v1668 = vtanh.pop %v1654
  %v1669 = vmul.f32 %v1655, 0.5
  %v1670 = vmul.f32 %v1656, 0.5
  %v1671 = vmul.f32 %v1657, 0.5
  %v1672 = vmul.f32 %v1658, 0.5
  %v1673 = vmul.f32 %v1659, 0.5
  %v1674 = vmul.f32 %v1660, 0.5
  %v1675 = vmul.f32 %v1661, 0.5
  %v1676 = vmul.f32 %v1662, 0.5
  %v1677 = vmul.f32 %v1663, 0.5
  %v1678 = vmul.f32 %v1664, 0.5
  %v1679 = vmul.f32 %v1665, 0.5
  %v1680 = vmul.f32 %v1666, 0.5
  %v1681 = vmul.f32 %v1667, 0.5
  %v1682 = vmul.f32 %v1668, 0.5
  %v1683 = vadd.f32 %v1669, 0.5
  %v1684 = vadd.f32 %v1670, 0.5
  %v1685 = vadd.f32 %v1671, 0.5
  %v1686 = vadd.f32 %v1672, 0.5
  %v1687 = vadd.f32 %v1673, 0.5
  %v1688 = vadd.f32 %v1674, 0.5
  %v1689 = vadd.f32 %v1675, 0.5
  %v1690 = vadd.f32 %v1676, 0.5
  %v1691 = vadd.f32 %v1677, 0.5
  %v1692 = vadd.f32 %v1678, 0.5
  %v1693 = vadd.f32 %v1679, 0.5
  %v1694 = vadd.f32 %v1680, 0.5
  %v1695 = vadd.f32 %v1681, 0.5
  %v1696 = vadd.f32 %v1682, 0.5
  %v1697 = vpack.c.bf16 %v1690, %v1683
  %v1698 = vpack.c.bf16 %v1691, %v1684
  %v1699 = vpack.c.bf16 %v1692, %v1685
  %v1700 = vpack.c.bf16 %v1693, %v1686
  %v1701 = vpack.c.bf16 %v1694, %v1687
  %v1702 = vpack.c.bf16 %v1695, %v1688
  %v1703 = vpack.c.bf16 %v1696, %v1689
  %v1711 = vunpack.c.l.b16 %v1697
  %v1712 = vunpack.c.l.b16 %v1698
  %v1713 = vunpack.c.l.b16 %v1699
  %v1714 = vunpack.c.l.b16 %v1700
  %v1715 = vunpack.c.l.b16 %v1701
  %v1716 = vunpack.c.l.b16 %v1702
  %v1717 = vunpack.c.l.b16 %v1703
  %v1718 = vunpack.c.h.b16 %v1697
  %v1719 = vunpack.c.h.b16 %v1698
  %v1720 = vunpack.c.h.b16 %v1699
  %v1721 = vunpack.c.h.b16 %v1700
  %v1722 = vunpack.c.h.b16 %v1701
  %v1723 = vunpack.c.h.b16 %v1702
  %v1724 = vunpack.c.h.b16 %v1703
  %v1725 = vpack.c.b16 %v1712, %v1711
  %v1726 = vpack.c.b16 %v1714, %v1713
  %v1727 = vpack.c.b16 %v1716, %v1715
  %v1728 = vpack.c.b16 %v1717, %v1717
  %v1729 = vpack.c.b16 %v1719, %v1718
  %v1730 = vpack.c.b16 %v1721, %v1720
  %v1731 = vpack.c.b16 %v1723, %v1722
  %v1732 = vpack.c.b16 %v1724, %v1724
  %1741 = vst [vmem:[%s15] sm:$0xff] %v1725
  %1742 = vst [vmem:[%s15 + $0x8] sm:$0xff] %v1726
  %1743 = vst [vmem:[%s15 + $0x10] sm:$0xff] %v1727
  %vm1744 = vcmask 125952
  %1745 = vst.msk [vmem:[%s15 + $0x18] sm:$0xf] %vm1744, %v1728
  %1746 = vst [vmem:[%s15 + $0x1c] sm:$0xff] %v1729
  %1747 = vst [vmem:[%s15 + $0x24] sm:$0xff] %v1730
  %1748 = vst [vmem:[%s15 + $0x2c] sm:$0xff] %v1731
  %1749 = vst.msk [vmem:[%s15 + $0x34] sm:$0xf] %vm1744, %v1732
  // Predicated region
  $region62: #{autoencoder_forward.1} parent=0 // pred_check
    _
  $region63: #{autoencoder_forward.1} parent=0 // pred_check_branch
    %1751 = sbr.rel (0) target = $region65
  $region64: #{autoencoder_forward.1} parent=0 // pred_region
    _
  $region65: #{autoencoder_forward.1} parent=0 // pred_fallthru
    _
  // Predicated region
  $region66: #{autoencoder_forward.1} parent=0 // pred_check
    _
  $region67: #{autoencoder_forward.1} parent=0 // pred_check_branch
    %1753 = sbr.rel (0) target = $region69
  $region68: #{autoencoder_forward.1} parent=0 // pred_region
    _
  $region69: #{autoencoder_forward.1} parent=0 // pred_fallthru
    _

</llo_original>
